<compile_context>
chip_gen: v7x
topology: tpu7x:2x2x1
jax: 0.10.0
libtpu: 0.0.40
codegen_flags: <defaults>
</compile_context>

<pallas_src>
import functools

import numpy as np
import jax
import jax.numpy as jnp
from jax.experimental import pallas as pl
from jax.experimental.pallas import tpu as pltpu

INCH = 4                            # inChanel (feature channels)
FEAPE = 6                           # feape
FEATC = 128                         # featureC (hidden width)
PEC = FEAPE * INCH                  # 24 positional-encoding channels
IN_MLPC = 2 * PEC + INCH            # 52

# Constant PE matrix (transposed layout): peT = E_T @ featT,
#   E_T[c*FEAPE + f, c] = 2**f   ->   peT[c*FEAPE + f, n] = featT[c, n] * 2**f
_E_T = np.zeros((PEC, INCH), np.float32)
for _c in range(INCH):
    _E_T[_c * FEAPE:(_c + 1) * FEAPE, _c] = 2.0 ** np.arange(FEAPE)


def _round_up(x, m):
    return ((x + m - 1) // m) * m


def mlp_render_kernel(featT_ref, e_ref, w1f_ref, w1s_ref, w1c_ref, b1_ref,
                      w2_ref, b2_ref, w3_ref, b3_ref, outT_ref):
    featT = featT_ref[...]                                   # (INCH, TN) f32

    # Positional encoding via a tiny matmul (keeps index plumbing on the MXU,
    # no lane slicing / lane concat).  Scaling is by exact powers of two and the
    # trig arguments stay f32.
    peT = jnp.dot(e_ref[...], featT,
                  preferred_element_type=jnp.float32)        # (PEC, TN) f32
    sin_pe = jnp.sin(peT).astype(jnp.bfloat16)
    cos_pe = jnp.cos(peT).astype(jnp.bfloat16)
    featT_b = featT.astype(jnp.bfloat16)

    # Layer 1: W1 split into feat/sin/cos pieces -> three bf16 MXU dots, f32 acc,
    # no concatenation of the 52-wide mlp_in ever materialized.
    h = (jnp.dot(w1f_ref[...], featT_b, preferred_element_type=jnp.float32)
         + jnp.dot(w1s_ref[...], sin_pe, preferred_element_type=jnp.float32)
         + jnp.dot(w1c_ref[...], cos_pe, preferred_element_type=jnp.float32)
         + b1_ref[...])                                      # (FEATC, TN) f32
    h = jnp.maximum(h, 0.0).astype(jnp.bfloat16)

    # Layer 2
    h = jnp.dot(w2_ref[...], h,
                preferred_element_type=jnp.float32) + b2_ref[...]
    h = jnp.maximum(h, 0.0).astype(jnp.bfloat16)

    # Layer 3 + sigmoid, lane-dense (3, TN) store.
    rgbT = jnp.dot(w3_ref[...], h,
                   preferred_element_type=jnp.float32) + b3_ref[...]
    outT_ref[...] = jax.nn.sigmoid(rgbT)


@functools.partial(jax.jit, static_argnames=("tn",))
def mlp_render_fea_woview(features, w1, b1, w2, b2, w3, b3, tn=4096):
    """features: (N, INCH) f32. w1:(52,128) b1:(1,128) w2:(128,128) b2:(1,128)
    w3:(128,3) b3:(1,3) — (in,out) layout, i.e. y = x @ W + b.  Returns (N,3)."""
    N, C = features.shape
    assert C == INCH

    # Keep >= 2 grid steps when N allows it (v7x: 2 TensorCores share the
    # "parallel" grid axis), while still using a large lane tile.
    tn = min(tn, _round_up(-(-N // 2), 128))
    n_blocks = -(-N // tn)
    n_pad = n_blocks * tn

    # Transposed (feature-major) layout: points on lanes.
    featT = jnp.pad(features.astype(jnp.float32).T, ((0, 0), (0, n_pad - N)))

    # Split W1 by mlp_in sections [feat(4) | sin(24) | cos(24)], transpose all
    # weights for the x^T layout, and pre-cast matmul weights to bf16.
    w1f = w1[:INCH].T.astype(jnp.bfloat16)               # (FEATC, INCH)
    w1s = w1[INCH:INCH + PEC].T.astype(jnp.bfloat16)     # (FEATC, PEC)
    w1c = w1[INCH + PEC:].T.astype(jnp.bfloat16)         # (FEATC, PEC)
    w2t = w2.T.astype(jnp.bfloat16)                      # (FEATC, FEATC)
    w3t = w3.T.astype(jnp.bfloat16)                      # (3, FEATC)
    b1t = b1.reshape(FEATC, 1).astype(jnp.float32)
    b2t = b2.reshape(FEATC, 1).astype(jnp.float32)
    b3t = b3.reshape(3, 1).astype(jnp.float32)
    e = jnp.asarray(_E_T)                                # (PEC, INCH) f32

    outT = pl.pallas_call(
        mlp_render_kernel,
        out_shape=jax.ShapeDtypeStruct((3, n_pad), jnp.float32),
        grid_spec=pltpu.PrefetchScalarGridSpec(
            num_scalar_prefetch=0,
            grid=(n_blocks,),
            in_specs=[
                pl.BlockSpec((INCH, tn), lambda i: (0, i)),      # features^T
                pl.BlockSpec((PEC, INCH), lambda i: (0, 0)),     # E (PE freqs)
                pl.BlockSpec((FEATC, INCH), lambda i: (0, 0)),   # W1 (feat part)
                pl.BlockSpec((FEATC, PEC), lambda i: (0, 0)),    # W1 (sin part)
                pl.BlockSpec((FEATC, PEC), lambda i: (0, 0)),    # W1 (cos part)
                pl.BlockSpec((FEATC, 1), lambda i: (0, 0)),      # b1
                pl.BlockSpec((FEATC, FEATC), lambda i: (0, 0)),  # W2
                pl.BlockSpec((FEATC, 1), lambda i: (0, 0)),      # b2
                pl.BlockSpec((3, FEATC), lambda i: (0, 0)),      # W3
                pl.BlockSpec((3, 1), lambda i: (0, 0)),          # b3
            ],
            out_specs=pl.BlockSpec((3, tn), lambda i: (0, i)),
        ),
        compiler_params=pltpu.CompilerParams(
            dimension_semantics=("parallel",)),
    )(featT, e, w1f, w1s, w1c, b1t, w2t, b2t, w3t, b3t)

    return outT[:, :N].T                                  # (N, 3)


def reference_jax(features, w1, b1, w2, b2, w3, b3):
    """Plain-JAX f32 mirror of the PyTorch forward (sanity check)."""
    hp = jax.lax.Precision.HIGHEST
    freqs = 2.0 ** jnp.arange(FEAPE, dtype=jnp.float32)
    pe = (features[..., None] * freqs).reshape(features.shape[0], PEC)
    mlp_in = jnp.concatenate([features, jnp.sin(pe), jnp.cos(pe)], axis=-1)
    h = jnp.maximum(jnp.dot(mlp_in, w1, precision=hp) + b1, 0.0)
    h = jnp.maximum(jnp.dot(h, w2, precision=hp) + b2, 0.0)
    return jax.nn.sigmoid(jnp.dot(h, w3, precision=hp) + b3)


if __name__ == "__main__":
    key = jax.random.PRNGKey(0)
    kf, kp, kv, k1, k2, k3, kb1, kb2 = jax.random.split(key, 8)

    N = 512  # number of sample points (small test; kernel tiles lanes by tn)
    features = jax.random.normal(kf, (N, INCH), dtype=jnp.float32)
    pts = jax.random.normal(kp, (N, 3), dtype=jnp.float32)       # unused by fwd
    viewdirs = jax.random.normal(kv, (N, 3), dtype=jnp.float32)  # unused by fwd

    # Deterministic parameter init (uniform, ~PyTorch Linear fan-in scaling).
    def init_linear(k, fan_in, fan_out):
        bound = 1.0 / float(np.sqrt(fan_in))
        return jax.random.uniform(k, (fan_in, fan_out), jnp.float32,
                                  -bound, bound)

    w1 = init_linear(k1, IN_MLPC, FEATC)
    b1 = jax.random.uniform(kb1, (1, FEATC), jnp.float32,
                            -1.0 / float(np.sqrt(IN_MLPC)),
                            1.0 / float(np.sqrt(IN_MLPC)))
    w2 = init_linear(k2, FEATC, FEATC)
    b2 = jax.random.uniform(kb2, (1, FEATC), jnp.float32,
                            -1.0 / float(np.sqrt(FEATC)),
                            1.0 / float(np.sqrt(FEATC)))
    w3 = init_linear(k3, FEATC, 3)
    b3 = jnp.zeros((1, 3), jnp.float32)  # constant_(bias, 0) in __init__

    rgb = mlp_render_fea_woview(features, w1, b1, w2, b2, w3, b3)
    rgb = jax.block_until_ready(rgb)

    ref = reference_jax(features, w1, b1, w2, b2, w3, b3)
    assert rgb.shape == (N, 3)
    err = float(jnp.max(jnp.abs(rgb - ref)))
    # bf16 matmul operands (f32 accumulation) => small post-sigmoid deviation.
    assert err < 5e-3, f"mismatch vs reference: {err}"

    print("KERNEL_OK")
</pallas_src>

<mosaic_0001>
module attributes {stable_mosaic.version = 11 : i64} {
  func.func @mlp_render_kernel(%arg0: i32, %arg1: memref<4x256xf32, #tpu.memory_space<vmem>>, %arg2: memref<24x4xf32, #tpu.memory_space<vmem>>, %arg3: memref<128x4xbf16, #tpu.memory_space<vmem>>, %arg4: memref<128x24xbf16, #tpu.memory_space<vmem>>, %arg5: memref<128x24xbf16, #tpu.memory_space<vmem>>, %arg6: memref<128x1xf32, #tpu.memory_space<vmem>>, %arg7: memref<128x128xbf16, #tpu.memory_space<vmem>>, %arg8: memref<128x1xf32, #tpu.memory_space<vmem>>, %arg9: memref<3x128xbf16, #tpu.memory_space<vmem>>, %arg10: memref<3x1xf32, #tpu.memory_space<vmem>>, %arg11: memref<3x256xf32, #tpu.memory_space<vmem>>) attributes {dimension_semantics = [#tpu.dimension_semantics<parallel>], iteration_bounds = array<i64: 2>, scalar_prefetch = 0 : i64, scratch_operands = 0 : i64, tpu.core_type = #tpu.core_type<tc>, window_params = [{transform_indices = @transform_0, window_bounds = array<i64: 4, 256>}, {pipeline_mode = #tpu.pipeline_mode<synchronous>, transform_indices = @transform_1, window_bounds = array<i64: 24, 4>}, {pipeline_mode = #tpu.pipeline_mode<synchronous>, transform_indices = @transform_2, window_bounds = array<i64: 128, 4>}, {pipeline_mode = #tpu.pipeline_mode<synchronous>, transform_indices = @transform_3, window_bounds = array<i64: 128, 24>}, {pipeline_mode = #tpu.pipeline_mode<synchronous>, transform_indices = @transform_4, window_bounds = array<i64: 128, 24>}, {pipeline_mode = #tpu.pipeline_mode<synchronous>, transform_indices = @transform_5, window_bounds = array<i64: 128, 1>}, {pipeline_mode = #tpu.pipeline_mode<synchronous>, transform_indices = @transform_6, window_bounds = array<i64: 128, 128>}, {pipeline_mode = #tpu.pipeline_mode<synchronous>, transform_indices = @transform_7, window_bounds = array<i64: 128, 1>}, {pipeline_mode = #tpu.pipeline_mode<synchronous>, transform_indices = @transform_8, window_bounds = array<i64: 3, 128>}, {pipeline_mode = #tpu.pipeline_mode<synchronous>, transform_indices = @transform_9, window_bounds = array<i64: 3, 1>}, {transform_indices = @transform_10, window_bounds = array<i64: 3, 256>}]} {
    %c0 = arith.constant 0 : index
    %c0_0 = arith.constant 0 : index
    %0 = vector.load %arg1[%c0, %c0_0] : memref<4x256xf32, #tpu.memory_space<vmem>>, vector<4x256xf32>
    %c0_1 = arith.constant 0 : index
    %c0_2 = arith.constant 0 : index
    %1 = vector.load %arg2[%c0_1, %c0_2] : memref<24x4xf32, #tpu.memory_space<vmem>>, vector<24x4xf32>
    %cst = arith.constant dense<0.000000e+00> : vector<24x256xf32>
    %2 = tpu.matmul %1, %0, %cst {dimension_numbers = #tpu.dot_dimension_numbers<[1], [0], [0], [1], [0, 0, 1, 1], [], []>} : vector<24x4xf32>, vector<4x256xf32>, vector<24x256xf32> -> vector<24x256xf32>
    %3 = math.sin %2 : vector<24x256xf32>
    %4 = arith.truncf %3 : vector<24x256xf32> to vector<24x256xbf16>
    %5 = math.cos %2 : vector<24x256xf32>
    %6 = arith.truncf %5 : vector<24x256xf32> to vector<24x256xbf16>
    %7 = arith.truncf %0 : vector<4x256xf32> to vector<4x256xbf16>
    %c0_3 = arith.constant 0 : index
    %c0_4 = arith.constant 0 : index
    %8 = vector.load %arg3[%c0_3, %c0_4] : memref<128x4xbf16, #tpu.memory_space<vmem>>, vector<128x4xbf16>
    %cst_5 = arith.constant dense<0.000000e+00> : vector<128x256xf32>
    %9 = tpu.matmul %8, %7, %cst_5 {dimension_numbers = #tpu.dot_dimension_numbers<[1], [0], [0], [1], [0, 0, 1, 1], [], []>} : vector<128x4xbf16>, vector<4x256xbf16>, vector<128x256xf32> -> vector<128x256xf32>
    %c0_6 = arith.constant 0 : index
    %c0_7 = arith.constant 0 : index
    %10 = vector.load %arg4[%c0_6, %c0_7] : memref<128x24xbf16, #tpu.memory_space<vmem>>, vector<128x24xbf16>
    %cst_8 = arith.constant dense<0.000000e+00> : vector<128x256xf32>
    %11 = tpu.matmul %10, %4, %cst_8 {dimension_numbers = #tpu.dot_dimension_numbers<[1], [0], [0], [1], [0, 0, 1, 1], [], []>} : vector<128x24xbf16>, vector<24x256xbf16>, vector<128x256xf32> -> vector<128x256xf32>
    %12 = arith.addf %9, %11 : vector<128x256xf32>
    %c0_9 = arith.constant 0 : index
    %c0_10 = arith.constant 0 : index
    %13 = vector.load %arg5[%c0_9, %c0_10] : memref<128x24xbf16, #tpu.memory_space<vmem>>, vector<128x24xbf16>
    %cst_11 = arith.constant dense<0.000000e+00> : vector<128x256xf32>
    %14 = tpu.matmul %13, %6, %cst_11 {dimension_numbers = #tpu.dot_dimension_numbers<[1], [0], [0], [1], [0, 0, 1, 1], [], []>} : vector<128x24xbf16>, vector<24x256xbf16>, vector<128x256xf32> -> vector<128x256xf32>
    %15 = arith.addf %12, %14 : vector<128x256xf32>
    %c0_12 = arith.constant 0 : index
    %c0_13 = arith.constant 0 : index
    %16 = vector.load %arg6[%c0_12, %c0_13] : memref<128x1xf32, #tpu.memory_space<vmem>>, vector<128x1xf32>
    %17 = vector.broadcast %16 : vector<128x1xf32> to vector<128x256xf32>
    %18 = arith.addf %15, %17 : vector<128x256xf32>
    %cst_14 = arith.constant 0.000000e+00 : f32
    %19 = vector.broadcast %cst_14 : f32 to vector<128x256xf32>
    %20 = arith.maximumf %18, %19 : vector<128x256xf32>
    %21 = arith.truncf %20 : vector<128x256xf32> to vector<128x256xbf16>
    %c0_15 = arith.constant 0 : index
    %c0_16 = arith.constant 0 : index
    %22 = vector.load %arg7[%c0_15, %c0_16] : memref<128x128xbf16, #tpu.memory_space<vmem>>, vector<128x128xbf16>
    %cst_17 = arith.constant dense<0.000000e+00> : vector<128x256xf32>
    %23 = tpu.matmul %22, %21, %cst_17 {dimension_numbers = #tpu.dot_dimension_numbers<[1], [0], [0], [1], [0, 0, 1, 1], [], []>} : vector<128x128xbf16>, vector<128x256xbf16>, vector<128x256xf32> -> vector<128x256xf32>
    %c0_18 = arith.constant 0 : index
    %c0_19 = arith.constant 0 : index
    %24 = vector.load %arg8[%c0_18, %c0_19] : memref<128x1xf32, #tpu.memory_space<vmem>>, vector<128x1xf32>
    %25 = vector.broadcast %24 : vector<128x1xf32> to vector<128x256xf32>
    %26 = arith.addf %23, %25 : vector<128x256xf32>
    %cst_20 = arith.constant 0.000000e+00 : f32
    %27 = vector.broadcast %cst_20 : f32 to vector<128x256xf32>
    %28 = arith.maximumf %26, %27 : vector<128x256xf32>
    %29 = arith.truncf %28 : vector<128x256xf32> to vector<128x256xbf16>
    %c0_21 = arith.constant 0 : index
    %c0_22 = arith.constant 0 : index
    %30 = vector.load %arg9[%c0_21, %c0_22] : memref<3x128xbf16, #tpu.memory_space<vmem>>, vector<3x128xbf16>
    %cst_23 = arith.constant dense<0.000000e+00> : vector<3x256xf32>
    %31 = tpu.matmul %30, %29, %cst_23 {dimension_numbers = #tpu.dot_dimension_numbers<[1], [0], [0], [1], [0, 0, 1, 1], [], []>} : vector<3x128xbf16>, vector<128x256xbf16>, vector<3x256xf32> -> vector<3x256xf32>
    %c0_24 = arith.constant 0 : index
    %c0_25 = arith.constant 0 : index
    %32 = vector.load %arg10[%c0_24, %c0_25] : memref<3x1xf32, #tpu.memory_space<vmem>>, vector<3x1xf32>
    %33 = vector.broadcast %32 : vector<3x1xf32> to vector<3x256xf32>
    %34 = arith.addf %31, %33 : vector<3x256xf32>
    %35 = arith.negf %34 : vector<3x256xf32>
    %36 = math.exp %35 : vector<3x256xf32>
    %cst_26 = arith.constant 1.000000e+00 : f32
    %37 = vector.broadcast %cst_26 : f32 to vector<3x256xf32>
    %38 = arith.addf %37, %36 : vector<3x256xf32>
    %39 = arith.divf %37, %38 : vector<3x256xf32>
    %c0_27 = arith.constant 0 : index
    %c0_28 = arith.constant 0 : index
    %40 = vector.load %arg11[%c0_27, %c0_28] : memref<3x256xf32, #tpu.memory_space<vmem>>, vector<3x256xf32>
    tpu.vector_store %arg11[%c0_27, %c0_28], %39 {strides = array<i32>} : memref<3x256xf32, #tpu.memory_space<vmem>>, vector<3x256xf32>,
    return
  }
  func.func @transform_0(%arg0: i32) -> (i32, i32) {
    %c0_i32 = arith.constant 0 : i32
    %c0_i32_0 = arith.constant 0 : i32
    return %c0_i32, %arg0 : i32, i32
  }
  func.func @transform_1(%arg0: i32) -> (i32, i32) {
    %c0_i32 = arith.constant 0 : i32
    %c0_i32_0 = arith.constant 0 : i32
    %c0_i32_1 = arith.constant 0 : i32
    return %c0_i32, %c0_i32_0 : i32, i32
  }
  func.func @transform_2(%arg0: i32) -> (i32, i32) {
    %c0_i32 = arith.constant 0 : i32
    %c0_i32_0 = arith.constant 0 : i32
    %c0_i32_1 = arith.constant 0 : i32
    return %c0_i32, %c0_i32_0 : i32, i32
  }
  func.func @transform_3(%arg0: i32) -> (i32, i32) {
    %c0_i32 = arith.constant 0 : i32
    %c0_i32_0 = arith.constant 0 : i32
    %c0_i32_1 = arith.constant 0 : i32
    return %c0_i32, %c0_i32_0 : i32, i32
  }
  func.func @transform_4(%arg0: i32) -> (i32, i32) {
    %c0_i32 = arith.constant 0 : i32
    %c0_i32_0 = arith.constant 0 : i32
    %c0_i32_1 = arith.constant 0 : i32
    return %c0_i32, %c0_i32_0 : i32, i32
  }
  func.func @transform_5(%arg0: i32) -> (i32, i32) {
    %c0_i32 = arith.constant 0 : i32
    %c0_i32_0 = arith.constant 0 : i32
    %c0_i32_1 = arith.constant 0 : i32
    return %c0_i32, %c0_i32_0 : i32, i32
  }
  func.func @transform_6(%arg0: i32) -> (i32, i32) {
    %c0_i32 = arith.constant 0 : i32
    %c0_i32_0 = arith.constant 0 : i32
    %c0_i32_1 = arith.constant 0 : i32
    return %c0_i32, %c0_i32_0 : i32, i32
  }
  func.func @transform_7(%arg0: i32) -> (i32, i32) {
    %c0_i32 = arith.constant 0 : i32
    %c0_i32_0 = arith.constant 0 : i32
    %c0_i32_1 = arith.constant 0 : i32
    return %c0_i32, %c0_i32_0 : i32, i32
  }
  func.func @transform_8(%arg0: i32) -> (i32, i32) {
    %c0_i32 = arith.constant 0 : i32
    %c0_i32_0 = arith.constant 0 : i32
    %c0_i32_1 = arith.constant 0 : i32
    return %c0_i32, %c0_i32_0 : i32, i32
  }
  func.func @transform_9(%arg0: i32) -> (i32, i32) {
    %c0_i32 = arith.constant 0 : i32
    %c0_i32_0 = arith.constant 0 : i32
    %c0_i32_1 = arith.constant 0 : i32
    return %c0_i32, %c0_i32_0 : i32, i32
  }
  func.func @transform_10(%arg0: i32) -> (i32, i32) {
    %c0_i32 = arith.constant 0 : i32
    %c0_i32_0 = arith.constant 0 : i32
    return %c0_i32, %arg0 : i32, i32
  }
}

</mosaic_0001>

<llo_original>
// kernel: mlp_render_fea_woview.1
$region0: #{mlp_render_fea_woview.1}
  #allocation0 [shape = 'u32[]', space=smem, size = 0x4, offset = 0x4, fixed_abs, tag = 'smem constant byte address 0x4 - core index']
  #allocation1 [shape = 'u32[144,128]{1,0:T(1,128)}', space=vmem, size = 0x12000, scoped, tag = 'internal scratch']
  %s0 = inlined_call_operand.vmem [shape: f32[4,512], index: 0, kind: input, shape index: {}]
  %s1 = inlined_call_operand.vmem [shape: f32[24,4], index: 1, kind: input, shape index: {}]
  %s2 = inlined_call_operand.vmem [shape: bf16[128,4], index: 2, kind: input, shape index: {}]
  %s3 = inlined_call_operand.vmem [shape: bf16[128,24], index: 3, kind: input, shape index: {}]
  %s4 = inlined_call_operand.vmem [shape: bf16[128,24], index: 4, kind: input, shape index: {}]
  %s5 = inlined_call_operand.vmem [shape: f32[128,1], index: 5, kind: input, shape index: {}]
  %s6 = inlined_call_operand.vmem [shape: bf16[128,128], index: 6, kind: input, shape index: {}]
  %s7 = inlined_call_operand.vmem [shape: f32[128,1], index: 7, kind: input, shape index: {}]
  %s8 = inlined_call_operand.vmem [shape: bf16[3,128], index: 8, kind: input, shape index: {}]
  %s9 = inlined_call_operand.vmem [shape: f32[3,1], index: 9, kind: input, shape index: {}]
  %s10 = inlined_call_operand.hbm [shape: f32[3,512], index: 10, kind: output, shape index: {}]
  %s11 = sld [smem:[#allocation0]]
  $region73: #{mlp_render_fea_woview.1} parent=0
    _
  %s13 = ssub.s32 1, %s11
  %s14 = scalar_select 0, %s13, %s11
  $region1: #{mlp_render_fea_woview.1} parent=0
    #allocation2 [shape = 'u8[8192]{0}', space=vmem, size = 0x2000, scoped, tag = 'output window, operand 0']
    #allocation3 [shape = 's32[2]{0}', space=sflag, size = 0x8, scoped, tag = 'scoped memory for mlp_render_fea_woview.1']
    %15 = vsyncpa [#allocation3], 0
    %s16 = scalar_lea.sflag [#allocation3], 1
    %17 = vsyncpa %s16, 0
    loop: start=0, step=1, limit=4
    $region2: #{mlp_render_fea_woview.1} parent=1 // loop_pre_header
      _
    $region3: #{mlp_render_fea_woview.1} parent=1 // loop_header
      %s19 = sphi 0, %s23
      %p20 = scmp.ge.s32.totalorder %s19, 4
      %s29 = sphi 0, %s31
      %s32 = sphi 0, %s29
      %s33 = sphi 0, %s32
      %s49 = sphi 0, %s33
      %s53 = sphi 0, %s53
      %s55 = sphi 0, %s53
      %s56 = sphi 0, %s55
      %s70 = sphi 0, %s56
      %s74 = sphi 0, %s74
      %s76 = sphi 0, %s74
      %s77 = sphi 0, %s76
      %s91 = sphi 0, %s77
      %s95 = sphi 0, %s95
      %s97 = sphi 0, %s95
      %s98 = sphi 0, %s97
      %s112 = sphi 0, %s98
      %s116 = sphi 0, %s116
      %s118 = sphi 0, %s116
      %s119 = sphi 0, %s118
      %s133 = sphi 0, %s119
      %s137 = sphi 0, %s137
      %s139 = sphi 0, %s137
      %s140 = sphi 0, %s139
      %s154 = sphi 0, %s140
      %s158 = sphi 0, %s158
      %s160 = sphi 0, %s158
      %s161 = sphi 0, %s160
      %s175 = sphi 0, %s161
      %s179 = sphi 0, %s179
      %s181 = sphi 0, %s179
      %s182 = sphi 0, %s181
      %s196 = sphi 0, %s182
      %s200 = sphi 0, %s200
      %s202 = sphi 0, %s200
      %s203 = sphi 0, %s202
      %s217 = sphi 0, %s203
      %s221 = sphi 0, %s221
      %s223 = sphi 0, %s221
      %s224 = sphi 0, %s223
      %s238 = sphi 0, %s224
      %s244 = sphi 0, %s246
      %s247 = sphi 0, %s244
      %s248 = sphi 0, %s247
      %s264 = sphi 0, %s248
    $region4: #{mlp_render_fea_woview.1} parent=1 // loop_header_branch
      %22 = sbr.rel (%p20) target = $region8
    $region5: #{mlp_render_fea_woview.1} parent=1 // loop_body
      %s24 = ssub.s32 %s19, 1
      %s25 = ssub.s32 %s19, 2
      %s26 = sadd.s32 %s19, 1
      %s27 = ssub.s32 %s19, %s26
      %p28 = scmp.eq.s32.totalorder %s27, 0
      %s30 = sadd.s32 %s29, 1
      %s31 = scalar_select %p28, %s29, %s30
      %p34 = pneg %p28
      %p35 = scmp.eq.s32.totalorder %s19, 1
      %p36 = por %p34, %p35
      %p37 = scmp.ne.s32.totalorder %s29, %s32
      %p38 = scmp.eq.s32.totalorder %s19, 0
      %p39 = por %p37, %p38
      %p40 = scmp.ne.s32.totalorder %s29, %s32
      %p41 = scmp.eq.s32.totalorder %s24, 1
      %p42 = por %p40, %p41
      %p43 = scmp.ne.s32.totalorder %s32, %s33
      %p44 = scmp.eq.s32.totalorder %s24, 0
      %p45 = por %p43, %p44
      %p46 = scmp.ne.s32.totalorder %s32, %s33
      %p47 = scmp.eq.s32.totalorder %s25, 1
      %p48 = por %p46, %p47
      %p50 = scmp.ne.s32.totalorder %s33, %s49
      %p51 = scmp.eq.s32.totalorder %s25, 0
      %p52 = por %p50, %p51
      %s54 = sadd.s32 %s53, 1
      %p57 = scmp.eq.s32.totalorder %s19, 1
      %p58 = scmp.ne.s32.totalorder %s53, %s55
      %p59 = scmp.eq.s32.totalorder %s19, 0
      %p60 = por %p58, %p59
      %p61 = scmp.ne.s32.totalorder %s53, %s55
      %p62 = scmp.eq.s32.totalorder %s24, 1
      %p63 = por %p61, %p62
      %p64 = scmp.ne.s32.totalorder %s55, %s56
      %p65 = scmp.eq.s32.totalorder %s24, 0
      %p66 = por %p64, %p65
      %p67 = scmp.ne.s32.totalorder %s55, %s56
      %p68 = scmp.eq.s32.totalorder %s25, 1
      %p69 = por %p67, %p68
      %p71 = scmp.ne.s32.totalorder %s56, %s70
      %p72 = scmp.eq.s32.totalorder %s25, 0
      %p73 = por %p71, %p72
      %s75 = sadd.s32 %s74, 1
      %p78 = scmp.eq.s32.totalorder %s19, 1
      %p79 = scmp.ne.s32.totalorder %s74, %s76
      %p80 = scmp.eq.s32.totalorder %s19, 0
      %p81 = por %p79, %p80
      %p82 = scmp.ne.s32.totalorder %s74, %s76
      %p83 = scmp.eq.s32.totalorder %s24, 1
      %p84 = por %p82, %p83
      %p85 = scmp.ne.s32.totalorder %s76, %s77
      %p86 = scmp.eq.s32.totalorder %s24, 0
      %p87 = por %p85, %p86
      %p88 = scmp.ne.s32.totalorder %s76, %s77
      %p89 = scmp.eq.s32.totalorder %s25, 1
      %p90 = por %p88, %p89
      %p92 = scmp.ne.s32.totalorder %s77, %s91
      %p93 = scmp.eq.s32.totalorder %s25, 0
      %p94 = por %p92, %p93
      %s96 = sadd.s32 %s95, 1
      %p99 = scmp.eq.s32.totalorder %s19, 1
      %p100 = scmp.ne.s32.totalorder %s95, %s97
      %p101 = scmp.eq.s32.totalorder %s19, 0
      %p102 = por %p100, %p101
      %p103 = scmp.ne.s32.totalorder %s95, %s97
      %p104 = scmp.eq.s32.totalorder %s24, 1
      %p105 = por %p103, %p104
      %p106 = scmp.ne.s32.totalorder %s97, %s98
      %p107 = scmp.eq.s32.totalorder %s24, 0
      %p108 = por %p106, %p107
      %p109 = scmp.ne.s32.totalorder %s97, %s98
      %p110 = scmp.eq.s32.totalorder %s25, 1
      %p111 = por %p109, %p110
      %p113 = scmp.ne.s32.totalorder %s98, %s112
      %p114 = scmp.eq.s32.totalorder %s25, 0
      %p115 = por %p113, %p114
      %s117 = sadd.s32 %s116, 1
      %p120 = scmp.eq.s32.totalorder %s19, 1
      %p121 = scmp.ne.s32.totalorder %s116, %s118
      %p122 = scmp.eq.s32.totalorder %s19, 0
      %p123 = por %p121, %p122
      %p124 = scmp.ne.s32.totalorder %s116, %s118
      %p125 = scmp.eq.s32.totalorder %s24, 1
      %p126 = por %p124, %p125
      %p127 = scmp.ne.s32.totalorder %s118, %s119
      %p128 = scmp.eq.s32.totalorder %s24, 0
      %p129 = por %p127, %p128
      %p130 = scmp.ne.s32.totalorder %s118, %s119
      %p131 = scmp.eq.s32.totalorder %s25, 1
      %p132 = por %p130, %p131
      %p134 = scmp.ne.s32.totalorder %s119, %s133
      %p135 = scmp.eq.s32.totalorder %s25, 0
      %p136 = por %p134, %p135
      %s138 = sadd.s32 %s137, 1
      %p141 = scmp.eq.s32.totalorder %s19, 1
      %p142 = scmp.ne.s32.totalorder %s137, %s139
      %p143 = scmp.eq.s32.totalorder %s19, 0
      %p144 = por %p142, %p143
      %p145 = scmp.ne.s32.totalorder %s137, %s139
      %p146 = scmp.eq.s32.totalorder %s24, 1
      %p147 = por %p145, %p146
      %p148 = scmp.ne.s32.totalorder %s139, %s140
      %p149 = scmp.eq.s32.totalorder %s24, 0
      %p150 = por %p148, %p149
      %p151 = scmp.ne.s32.totalorder %s139, %s140
      %p152 = scmp.eq.s32.totalorder %s25, 1
      %p153 = por %p151, %p152
      %p155 = scmp.ne.s32.totalorder %s140, %s154
      %p156 = scmp.eq.s32.totalorder %s25, 0
      %p157 = por %p155, %p156
      %s159 = sadd.s32 %s158, 1
      %p162 = scmp.eq.s32.totalorder %s19, 1
      %p163 = scmp.ne.s32.totalorder %s158, %s160
      %p164 = scmp.eq.s32.totalorder %s19, 0
      %p165 = por %p163, %p164
      %p166 = scmp.ne.s32.totalorder %s158, %s160
      %p167 = scmp.eq.s32.totalorder %s24, 1
      %p168 = por %p166, %p167
      %p169 = scmp.ne.s32.totalorder %s160, %s161
      %p170 = scmp.eq.s32.totalorder %s24, 0
      %p171 = por %p169, %p170
      %p172 = scmp.ne.s32.totalorder %s160, %s161
      %p173 = scmp.eq.s32.totalorder %s25, 1
      %p174 = por %p172, %p173
      %p176 = scmp.ne.s32.totalorder %s161, %s175
      %p177 = scmp.eq.s32.totalorder %s25, 0
      %p178 = por %p176, %p177
      %s180 = sadd.s32 %s179, 1
      %p183 = scmp.eq.s32.totalorder %s19, 1
      %p184 = scmp.ne.s32.totalorder %s179, %s181
      %p185 = scmp.eq.s32.totalorder %s19, 0
      %p186 = por %p184, %p185
      %p187 = scmp.ne.s32.totalorder %s179, %s181
      %p188 = scmp.eq.s32.totalorder %s24, 1
      %p189 = por %p187, %p188
      %p190 = scmp.ne.s32.totalorder %s181, %s182
      %p191 = scmp.eq.s32.totalorder %s24, 0
      %p192 = por %p190, %p191
      %p193 = scmp.ne.s32.totalorder %s181, %s182
      %p194 = scmp.eq.s32.totalorder %s25, 1
      %p195 = por %p193, %p194
      %p197 = scmp.ne.s32.totalorder %s182, %s196
      %p198 = scmp.eq.s32.totalorder %s25, 0
      %p199 = por %p197, %p198
      %s201 = sadd.s32 %s200, 1
      %p204 = scmp.eq.s32.totalorder %s19, 1
      %p205 = scmp.ne.s32.totalorder %s200, %s202
      %p206 = scmp.eq.s32.totalorder %s19, 0
      %p207 = por %p205, %p206
      %p208 = scmp.ne.s32.totalorder %s200, %s202
      %p209 = scmp.eq.s32.totalorder %s24, 1
      %p210 = por %p208, %p209
      %p211 = scmp.ne.s32.totalorder %s202, %s203
      %p212 = scmp.eq.s32.totalorder %s24, 0
      %p213 = por %p211, %p212
      %p214 = scmp.ne.s32.totalorder %s202, %s203
      %p215 = scmp.eq.s32.totalorder %s25, 1
      %p216 = por %p214, %p215
      %p218 = scmp.ne.s32.totalorder %s203, %s217
      %p219 = scmp.eq.s32.totalorder %s25, 0
      %p220 = por %p218, %p219
      %s222 = sadd.s32 %s221, 1
      %p225 = scmp.eq.s32.totalorder %s19, 1
      %p226 = scmp.ne.s32.totalorder %s221, %s223
      %p227 = scmp.eq.s32.totalorder %s19, 0
      %p228 = por %p226, %p227
      %p229 = scmp.ne.s32.totalorder %s221, %s223
      %p230 = scmp.eq.s32.totalorder %s24, 1
      %p231 = por %p229, %p230
      %p232 = scmp.ne.s32.totalorder %s223, %s224
      %p233 = scmp.eq.s32.totalorder %s24, 0
      %p234 = por %p232, %p233
      %p235 = scmp.ne.s32.totalorder %s223, %s224
      %p236 = scmp.eq.s32.totalorder %s25, 1
      %p237 = por %p235, %p236
      %p239 = scmp.ne.s32.totalorder %s224, %s238
      %p240 = scmp.eq.s32.totalorder %s25, 0
      %p241 = por %p239, %p240
      %s242 = ssub.s32 %s19, %s26
      %p243 = scmp.eq.s32.totalorder %s242, 0
      %s245 = sadd.s32 %s244, 1
      %s246 = scalar_select %p243, %s244, %s245
      %p249 = pneg %p243
      %p250 = scmp.eq.s32.totalorder %s19, 1
      %p251 = por %p249, %p250
      %p252 = scmp.ne.s32.totalorder %s244, %s247
      %p253 = scmp.eq.s32.totalorder %s19, 0
      %p254 = por %p252, %p253
      %p255 = scmp.ne.s32.totalorder %s244, %s247
      %p256 = scmp.eq.s32.totalorder %s24, 1
      %p257 = por %p255, %p256
      %p258 = scmp.ne.s32.totalorder %s247, %s248
      %p259 = scmp.eq.s32.totalorder %s24, 0
      %p260 = por %p258, %p259
      %p261 = scmp.ne.s32.totalorder %s247, %s248
      %p262 = scmp.eq.s32.totalorder %s25, 1
      %p263 = por %p261, %p262
      %p265 = scmp.ne.s32.totalorder %s248, %s264
      %p266 = scmp.eq.s32.totalorder %s25, 0
      %p267 = por %p265, %p266
      %p268 = scmp.le.s32.totalorder 1, %s19
      %p269 = scmp.lt.s32.totalorder %s19, 3
      %p270 = pnand %p268, %p269
      %p271 = pneg %p270
      // Predicated region
      $region9: #{mlp_render_fea_woview.1} parent=5 // pred_check
        _
      $region10: #{mlp_render_fea_woview.1} parent=5 // pred_check_branch
        %273 = sbr.rel (%p270) target = $region12
      $region11: #{mlp_render_fea_woview.1} parent=5 // pred_region
        %s274 = ssub.s32 %s19, 1
        // Predicated region
        $region13: #{mlp_render_fea_woview.1} parent=11 // pred_check
          %p275 = pneg %p66
        $region14: #{mlp_render_fea_woview.1} parent=11 // pred_check_branch
          %277 = sbr.rel (%p275) target = $region16
        $region15: #{mlp_render_fea_woview.1} parent=11 // pred_region
          _
        $region16: #{mlp_render_fea_woview.1} parent=11 // pred_fallthru
          _
        // Predicated region
        $region17: #{mlp_render_fea_woview.1} parent=11 // pred_check
          %p278 = pneg %p87
        $region18: #{mlp_render_fea_woview.1} parent=11 // pred_check_branch
          %280 = sbr.rel (%p278) target = $region20
        $region19: #{mlp_render_fea_woview.1} parent=11 // pred_region
          _
        $region20: #{mlp_render_fea_woview.1} parent=11 // pred_fallthru
          _
        // Predicated region
        $region21: #{mlp_render_fea_woview.1} parent=11 // pred_check
          %p281 = pneg %p108
        $region22: #{mlp_render_fea_woview.1} parent=11 // pred_check_branch
          %283 = sbr.rel (%p281) target = $region24
        $region23: #{mlp_render_fea_woview.1} parent=11 // pred_region
          _
        $region24: #{mlp_render_fea_woview.1} parent=11 // pred_fallthru
          _
        // Predicated region
        $region25: #{mlp_render_fea_woview.1} parent=11 // pred_check
          %p284 = pneg %p129
        $region26: #{mlp_render_fea_woview.1} parent=11 // pred_check_branch
          %286 = sbr.rel (%p284) target = $region28
        $region27: #{mlp_render_fea_woview.1} parent=11 // pred_region
          _
        $region28: #{mlp_render_fea_woview.1} parent=11 // pred_fallthru
          _
        // Predicated region
        $region29: #{mlp_render_fea_woview.1} parent=11 // pred_check
          %p287 = pneg %p150
        $region30: #{mlp_render_fea_woview.1} parent=11 // pred_check_branch
          %289 = sbr.rel (%p287) target = $region32
        $region31: #{mlp_render_fea_woview.1} parent=11 // pred_region
          _
        $region32: #{mlp_render_fea_woview.1} parent=11 // pred_fallthru
          _
        // Predicated region
        $region33: #{mlp_render_fea_woview.1} parent=11 // pred_check
          %p290 = pneg %p171
        $region34: #{mlp_render_fea_woview.1} parent=11 // pred_check_branch
          %292 = sbr.rel (%p290) target = $region36
        $region35: #{mlp_render_fea_woview.1} parent=11 // pred_region
          _
        $region36: #{mlp_render_fea_woview.1} parent=11 // pred_fallthru
          _
        // Predicated region
        $region37: #{mlp_render_fea_woview.1} parent=11 // pred_check
          %p293 = pneg %p192
        $region38: #{mlp_render_fea_woview.1} parent=11 // pred_check_branch
          %295 = sbr.rel (%p293) target = $region40
        $region39: #{mlp_render_fea_woview.1} parent=11 // pred_region
          _
        $region40: #{mlp_render_fea_woview.1} parent=11 // pred_fallthru
          _
        // Predicated region
        $region41: #{mlp_render_fea_woview.1} parent=11 // pred_check
          %p296 = pneg %p213
        $region42: #{mlp_render_fea_woview.1} parent=11 // pred_check_branch
          %298 = sbr.rel (%p296) target = $region44
        $region43: #{mlp_render_fea_woview.1} parent=11 // pred_region
          _
        $region44: #{mlp_render_fea_woview.1} parent=11 // pred_fallthru
          _
        // Predicated region
        $region45: #{mlp_render_fea_woview.1} parent=11 // pred_check
          %p299 = pneg %p234
        $region46: #{mlp_render_fea_woview.1} parent=11 // pred_check_branch
          %301 = sbr.rel (%p299) target = $region48
        $region47: #{mlp_render_fea_woview.1} parent=11 // pred_region
          _
        $region48: #{mlp_render_fea_woview.1} parent=11 // pred_fallthru
          _
      $region12: #{mlp_render_fea_woview.1} parent=5 // pred_fallthru
        _
      %p302 = scmp.lt.s32.totalorder %s19, 2
      // Predicated region
      $region49: #{mlp_render_fea_woview.1} parent=5 // pred_check
        %p303 = pneg %p302
      $region50: #{mlp_render_fea_woview.1} parent=5 // pred_check_branch
        %305 = sbr.rel (%p303) target = $region52
      $region51: #{mlp_render_fea_woview.1} parent=5 // pred_region
        // Predicated region
        $region53: #{mlp_render_fea_woview.1} parent=51 // pred_check
          %p306 = pneg %p39
        $region54: #{mlp_render_fea_woview.1} parent=51 // pred_check_branch
          %308 = sbr.rel (%p306) target = $region56
        $region55: #{mlp_render_fea_woview.1} parent=51 // pred_region
          %s309 = smul.u32 2, %s19
          %p310 = scmp.lt.s32.totalorder %s309, 3
          %s311 = scalar_select %p310, %s309, 3
          %s312 = smul.addr %s311, 4
          %s313 = scalar_lea.vmem %s0, %s312
          %s314 = smul.u32 2, %s19
        $region56: #{mlp_render_fea_woview.1} parent=51 // pred_fallthru
          _
      $region52: #{mlp_render_fea_woview.1} parent=5 // pred_fallthru
        _
      %p315 = scmp.le.s32.totalorder 1, %s19
      %p316 = scmp.lt.s32.totalorder %s19, 3
      %p317 = pnand %p315, %p316
      %p318 = pneg %p317
      // Predicated region
      $region57: #{mlp_render_fea_woview.1} parent=5 // pred_check
        _
      $region58: #{mlp_render_fea_woview.1} parent=5 // pred_check_branch
        %320 = sbr.rel (%p317) target = $region60
      $region59: #{mlp_render_fea_woview.1} parent=5 // pred_region
        %s321 = ssub.s32 %s19, 1
        %s322 = smul.u32 2, %s24
        %p323 = scmp.lt.s32.totalorder %s322, 3
        %s324 = scalar_select %p323, %s322, 3
        %s325 = smul.addr %s324, 4
        %s326 = scalar_lea.vmem %s0, %s325
        %p327 = pneg %p45
        %p328 = pneg %p42
        %p329 = pneg %p66
        %p330 = pneg %p63
        %p331 = pneg %p87
        %p332 = pneg %p84
        %p333 = pneg %p108
        %p334 = pneg %p105
        %p335 = pneg %p129
        %p336 = pneg %p126
        %p337 = pneg %p150
        %p338 = pneg %p147
        %p339 = pneg %p171
        %p340 = pneg %p168
        %p341 = pneg %p192
        %p342 = pneg %p189
        %p343 = pneg %p213
        %p344 = pneg %p210
        %p345 = pneg %p234
        %p346 = pneg %p231
        %p347 = pneg %p260
        %p348 = pneg %p257
        %s349 = sand.u32 %s247, 1
        %s350 = scalar_lea.sflag [#allocation3], %s349
        %s351 = sand.u32 %s247, 1
        %s352 = smul.addr %s351, 8
        %s353 = scalar_lea.vmem [#allocation2], %s352
        %s354 = smul.u32 2, %s24
        %p355 = scmp.lt.s32.totalorder %s354, 3
        %s356 = scalar_select %p355, %s354, 3
        %s357 = smul.addr %s356, 4
        %s358 = scalar_lea.vmem %s0, %s357
        %s359 = smul.u32 2, %s24
        %s360 = smul.u32 2, %s24
        %v362 = vld [vmem:[%s358] sm:$0xff]
        %v363 = vld [vmem:[%s1] sm:$0xff]
        %v364 = vld [vmem:[%s1 + $0x8] sm:$0xff]
        %v365 = vld [vmem:[%s1 + $0x10] sm:$0xff]
        %v367 = vcombine.high %v362, %v362
        %vm368 = vcmask 31744
        %v370 = vsel %vm368, %v363, 0
        %v373 = vsel %vm368, %v364, 0
        %v376 = vsel %vm368, %v365, 0
        %vm378 = vcmask 1043456
        %v379 = vsel %vm378, %v362, 0
        %v381 = vsel %vm378, %v367, 0
        %383 = vmatprep.subr.mxu0 %v381
        %384 = vmatpush1.msra.mxu0 %v379
        %385 = vmatprep.subr.mxu0 0.0
        %386 = vmatpush1.msra.mxu0 0.0
        %387 = vmatprep.subr.mxu0 0.0
        %388 = vmatpush1.msra.mxu0 0.0
        %389 = vmatprep.subr.mxu0 0.0
        %390 = vmatpush1.msra.mxu0 0.0
        %391 = vmatprep.subr.mxu0 0.0
        %392 = vmatpush1.msra.mxu0 0.0
        %393 = vmatprep.subr.mxu0 0.0
        %394 = vmatpush1.msra.mxu0 0.0
        %395 = vmatprep.subr.mxu0 0.0
        %396 = vmatpush1.msra.mxu0 0.0
        %397 = vmatprep.subr.mxu0 0.0
        %398 = vmatpush1.msra.mxu0 0.0
        %399 = vmatprep.subr.mxu0 0.0
        %400 = vmatpush1.msra.mxu0 0.0
        %401 = vmatprep.subr.mxu0 0.0
        %402 = vmatpush1.msra.mxu0 0.0
        %403 = vmatprep.subr.mxu0 0.0
        %404 = vmatpush1.msra.mxu0 0.0
        %405 = vmatprep.subr.mxu0 0.0
        %406 = vmatpush1.msra.mxu0 0.0
        %407 = vmatprep.subr.mxu0 0.0
        %408 = vmatpush1.msra.mxu0 0.0
        %409 = vmatprep.subr.mxu0 0.0
        %410 = vmatpush1.msra.mxu0 0.0
        %411 = vmatprep.subr.mxu0 0.0
        %412 = vmatpush1.msra.mxu0 0.0
        %413 = vmatprep.subr.mxu0 0.0
        %414 = vmatpush1.msra.mxu0 0.0
        %415 = vmatprep.subr.mxu0 0.0
        %416 = vmatpush1.msra.mxu0 0.0
        %417 = vmatprep.subr.mxu0 0.0
        %418 = vmatpush1.msra.mxu0 0.0
        %419 = vmatprep.subr.mxu0 0.0
        %420 = vmatpush1.msra.mxu0 0.0
        %421 = vmatprep.subr.mxu0 0.0
        %422 = vmatpush1.msra.mxu0 0.0
        %423 = vmatprep.subr.mxu0 0.0
        %424 = vmatpush1.msra.mxu0 0.0
        %425 = vmatprep.subr.mxu0 0.0
        %426 = vmatpush1.msra.mxu0 0.0
        %427 = vmatprep.subr.mxu0 0.0
        %428 = vmatpush1.msra.mxu0 0.0
        %429 = vmatprep.subr.mxu0 0.0
        %430 = vmatpush1.msra.mxu0 0.0
        %431 = vmatprep.subr.mxu0 0.0
        %432 = vmatpush1.msra.mxu0 0.0
        %433 = vmatprep.subr.mxu0 0.0
        %434 = vmatpush1.msra.mxu0 0.0
        %435 = vmatprep.subr.mxu0 0.0
        %436 = vmatpush1.msra.mxu0 0.0
        %437 = vmatprep.subr.mxu0 0.0
        %438 = vmatpush1.msra.mxu0 0.0
        %439 = vmatprep.subr.mxu0 0.0
        %440 = vmatpush1.msra.mxu0 0.0
        %441 = vmatprep.subr.mxu0 0.0
        %442 = vmatpush1.msra.mxu0 0.0
        %443 = vmatprep.subr.mxu0 0.0
        %444 = vmatpush1.msra.mxu0 0.0
        %445 = vmatprep.subr.mxu0 0.0
        %446 = vmatpush1.msra.mxu0 0.0
        %447 = vmatprep.mubr.f32.mxu0 0.0
        %448 = vmatmul.mubr.f32.gmra.mrb[0].mxu0 %v370
        %v449 = vpop.f32.mrb[0].mxu0
        %v450 = vadd.f32 0.0, %v449
        %v451 = vpop.f32.mrb[0].mxu0
        %v452 = vadd.f32 0.0, %v451
        %453 = vmatprep.mubr.f32.mxu0 0.0
        %454 = vmatmul.mubr.f32.gmra.mrb[0].mxu0 %v373
        %v455 = vpop.f32.mrb[0].mxu0
        %v456 = vadd.f32 0.0, %v455
        %v457 = vpop.f32.mrb[0].mxu0
        %v458 = vadd.f32 0.0, %v457
        %459 = vmatprep.mubr.f32.mxu0 0.0
        %460 = vmatmul.mubr.f32.gmra.mrb[0].mxu0 %v376
        %v461 = vpop.f32.mrb[0].mxu0
        %v462 = vadd.f32 0.0, %v461
        %v463 = vpop.f32.mrb[0].mxu0
        %v464 = vadd.f32 0.0, %v463
        %465 = vdwg.mxu0
        %v466 = vand.u32 2147483647, %v450
        %vm467 = vcmp.le.f32.partialorder %v466, 0.7853982
        %vm468 = vcmp.lt.s32.totalorder %v450, 0
        %v469 = vand.u32 %v450, 2139095040
        %v470 = vshrl.u32 %v469, 23
        %v471 = vsub.s32 %v470, 127
        %v472 = vand.u32 2147483647, %v450
        %v473 = vand.u32 %v472, 8388607
        %v474 = vor.u32 %v473, 8388608
        %v475 = vsub.s32 0, %v474
        %v476 = vadd.s32 %v471, 1
        %vm477 = vcmp.gt.s32.totalorder %v476, 0
        %v478 = vsel %vm477, %v476, 0
        %v479 = vshrl.u32 %v478, 5
        %v480 = vand.u32 %v478, 31
        %v481 = vsub.s32 32, %v480
        %v482 = vshrl.u32 683565275, %v481
        %v483 = vshll.u32 683565275, %v480
        %v484 = vshrl.u32 2475754826, %v481
        %v485 = vor.u32 %v483, %v484
        %v486 = vshll.u32 2475754826, %v480
        %v487 = vshrl.u32 2131351028, %v481
        %v488 = vor.u32 %v486, %v487
        %v489 = vshll.u32 2131351028, %v480
        %v490 = vshrl.u32 2102212464, %v481
        %v491 = vor.u32 %v489, %v490
        %v492 = vshll.u32 2102212464, %v480
        %v493 = vshrl.u32 920167782, %v481
        %v494 = vor.u32 %v492, %v493
        %v495 = vshll.u32 920167782, %v480
        %v496 = vshrl.u32 1326507024, %v481
        %v497 = vor.u32 %v495, %v496
        %vm498 = vcmp.lt.s32.totalorder %v479, 1
        %vm499 = vcmp.lt.s32.totalorder %v479, 2
        %vm500 = vcmp.lt.s32.totalorder %v479, 3
        %vm501 = vcmp.lt.s32.totalorder %v479, 4
        %v502 = vsel %vm498, %v482, %v485
        %v503 = vsel %vm501, %v491, 2102212464
        %v504 = vsel %vm500, %v488, %v503
        %v505 = vsel %vm499, %v502, %v504
        %v506 = vsel %vm498, %v485, %v488
        %v507 = vsel %vm501, %v494, 920167782
        %v508 = vsel %vm500, %v491, %v507
        %v509 = vsel %vm499, %v506, %v508
        %v510 = vsel %vm498, %v488, %v491
        %v511 = vsel %vm501, %v497, 1326507024
        %v512 = vsel %vm500, %v494, %v511
        %v513 = vsel %vm499, %v510, %v512
        %v514 = vshll.u32 %v474, 8
        %v515 = vmul.u32.u64.compose %v514, %v513
        %v516 = vextract.low.u32 %v515
        %v517 = vextract.high.u32 %v515
        %v518 = vmul.u32.u64.compose %v514, %v509
        %v519 = vextract.low.u32 %v518
        %v520 = vextract.high.u32 %v518
        %v521 = vmul.u32 %v514, %v505
        %v522 = vadd.s32 %v517, %v519
        %vm523 = vc.u32 %v517, %v519
        %v524 = vadd.s32 %v520, 1
        %v525 = vsel %vm523, %v524, %v520
        %v526 = vadd.s32 %v521, %v525
        %v527 = vadd.s32 %v526, 536870912
        %v528 = vshrl.u32 %v527, 30
        %v529 = vshll.u32 %v528, 30
        %v530 = vsub.s32 %v526, %v529
        %vm531 = vcmp.lt.s32.totalorder %v530, 0
        %v532 = vsub.s32 0, %v530
        %v533 = vsel %vm531, %v532, %v530
        %v534 = vclz %v533
        %v535 = vsub.s32 %v534, 2
        %vm536 = vcmp.gt.s32.totalorder 0, %v535
        %v537 = vsel %vm536, 0, %v535
        %v538 = vsub.s32 32, %v537
        %v539 = vshll.u32 %v530, %v537
        %v540 = vshrl.u32 %v522, %v538
        %v541 = vor.u32 %v539, %v540
        %v542 = vsub.s32 4294967266, %v537
        %v543 = vadd.s32 %v542, 127
        %v544 = vshll.u32 %v543, 23
        %v545 = vor.u32 4788187, %v544
        %v546 = vand.u32 2147483647, %v545
        %v548 = vcvt.s32.f32 %v541
        %v549 = vmul.f32 %v548, %v546
        %v550 = vxor.u32 %v549, 2147483648
        %v551 = vsel %vm468, %v550, %v549
        %v552 = vsub.s32 4, %v528
        %v553 = vsel %vm468, %v552, %v528
        %v554 = vsel %vm467, %v450, %v551
        %v555 = vsel %vm467, 0, %v553
        %v556 = vcosq.f32.pop %v554
        %v557 = vsinq.f32.pop %v554
        %vm558 = vweird.f32 %v450
        %v559 = vadd.s32 %v555, 3
        %v560 = vand.u32 %v559, 3
        %vm561 = vcmp.lt.s32.totalorder %v560, 2
        %vm562 = vcmp.eq.s32.totalorder %v560, 0
        %v563 = vxor.u32 %v557, 2147483648
        %v564 = vsel %vm562, %v556, %v563
        %vm565 = vcmp.eq.s32.totalorder %v560, 2
        %v566 = vxor.u32 %v556, 2147483648
        %v567 = vsel %vm565, %v566, %v557
        %v568 = vsel %vm561, %v564, %v567
        %v569 = vsel %vm558, nan, %v568
        %v570 = vand.u32 2147483647, %v452
        %vm571 = vcmp.le.f32.partialorder %v570, 0.7853982
        %vm572 = vcmp.lt.s32.totalorder %v452, 0
        %v573 = vand.u32 %v452, 2139095040
        %v574 = vshrl.u32 %v573, 23
        %v575 = vsub.s32 %v574, 127
        %v576 = vand.u32 2147483647, %v452
        %v577 = vand.u32 %v576, 8388607
        %v578 = vor.u32 %v577, 8388608
        %v579 = vsub.s32 0, %v578
        %v580 = vadd.s32 %v575, 1
        %vm581 = vcmp.gt.s32.totalorder %v580, 0
        %v582 = vsel %vm581, %v580, 0
        %v583 = vshrl.u32 %v582, 5
        %v584 = vand.u32 %v582, 31
        %v585 = vsub.s32 32, %v584
        %v586 = vshrl.u32 683565275, %v585
        %v587 = vshll.u32 683565275, %v584
        %v588 = vshrl.u32 2475754826, %v585
        %v589 = vor.u32 %v587, %v588
        %v590 = vshll.u32 2475754826, %v584
        %v591 = vshrl.u32 2131351028, %v585
        %v592 = vor.u32 %v590, %v591
        %v593 = vshll.u32 2131351028, %v584
        %v594 = vshrl.u32 2102212464, %v585
        %v595 = vor.u32 %v593, %v594
        %v596 = vshll.u32 2102212464, %v584
        %v597 = vshrl.u32 920167782, %v585
        %v598 = vor.u32 %v596, %v597
        %v599 = vshll.u32 920167782, %v584
        %v600 = vshrl.u32 1326507024, %v585
        %v601 = vor.u32 %v599, %v600
        %vm602 = vcmp.lt.s32.totalorder %v583, 1
        %vm603 = vcmp.lt.s32.totalorder %v583, 2
        %vm604 = vcmp.lt.s32.totalorder %v583, 3
        %vm605 = vcmp.lt.s32.totalorder %v583, 4
        %v606 = vsel %vm602, %v586, %v589
        %v607 = vsel %vm605, %v595, 2102212464
        %v608 = vsel %vm604, %v592, %v607
        %v609 = vsel %vm603, %v606, %v608
        %v610 = vsel %vm602, %v589, %v592
        %v611 = vsel %vm605, %v598, 920167782
        %v612 = vsel %vm604, %v595, %v611
        %v613 = vsel %vm603, %v610, %v612
        %v614 = vsel %vm602, %v592, %v595
        %v615 = vsel %vm605, %v601, 1326507024
        %v616 = vsel %vm604, %v598, %v615
        %v617 = vsel %vm603, %v614, %v616
        %v618 = vshll.u32 %v578, 8
        %v619 = vmul.u32.u64.compose %v618, %v617
        %v620 = vextract.low.u32 %v619
        %v621 = vextract.high.u32 %v619
        %v622 = vmul.u32.u64.compose %v618, %v613
        %v623 = vextract.low.u32 %v622
        %v624 = vextract.high.u32 %v622
        %v625 = vmul.u32 %v618, %v609
        %v626 = vadd.s32 %v621, %v623
        %vm627 = vc.u32 %v621, %v623
        %v628 = vadd.s32 %v624, 1
        %v629 = vsel %vm627, %v628, %v624
        %v630 = vadd.s32 %v625, %v629
        %v631 = vadd.s32 %v630, 536870912
        %v632 = vshrl.u32 %v631, 30
        %v633 = vshll.u32 %v632, 30
        %v634 = vsub.s32 %v630, %v633
        %vm635 = vcmp.lt.s32.totalorder %v634, 0
        %v636 = vsub.s32 0, %v634
        %v637 = vsel %vm635, %v636, %v634
        %v638 = vclz %v637
        %v639 = vsub.s32 %v638, 2
        %vm640 = vcmp.gt.s32.totalorder 0, %v639
        %v641 = vsel %vm640, 0, %v639
        %v642 = vsub.s32 32, %v641
        %v643 = vshll.u32 %v634, %v641
        %v644 = vshrl.u32 %v626, %v642
        %v645 = vor.u32 %v643, %v644
        %v646 = vsub.s32 4294967266, %v641
        %v647 = vadd.s32 %v646, 127
        %v648 = vshll.u32 %v647, 23
        %v649 = vor.u32 4788187, %v648
        %v650 = vand.u32 2147483647, %v649
        %v652 = vcvt.s32.f32 %v645
        %v653 = vmul.f32 %v652, %v650
        %v654 = vxor.u32 %v653, 2147483648
        %v655 = vsel %vm572, %v654, %v653
        %v656 = vsub.s32 4, %v632
        %v657 = vsel %vm572, %v656, %v632
        %v658 = vsel %vm571, %v452, %v655
        %v659 = vsel %vm571, 0, %v657
        %v660 = vcosq.f32.pop %v658
        %v661 = vsinq.f32.pop %v658
        %vm662 = vweird.f32 %v452
        %v663 = vadd.s32 %v659, 3
        %v664 = vand.u32 %v663, 3
        %vm665 = vcmp.lt.s32.totalorder %v664, 2
        %vm666 = vcmp.eq.s32.totalorder %v664, 0
        %v667 = vxor.u32 %v661, 2147483648
        %v668 = vsel %vm666, %v660, %v667
        %vm669 = vcmp.eq.s32.totalorder %v664, 2
        %v670 = vxor.u32 %v660, 2147483648
        %v671 = vsel %vm669, %v670, %v661
        %v672 = vsel %vm665, %v668, %v671
        %v673 = vsel %vm662, nan, %v672
        %v674 = vand.u32 2147483647, %v456
        %vm675 = vcmp.le.f32.partialorder %v674, 0.7853982
        %vm676 = vcmp.lt.s32.totalorder %v456, 0
        %v677 = vand.u32 %v456, 2139095040
        %v678 = vshrl.u32 %v677, 23
        %v679 = vsub.s32 %v678, 127
        %v680 = vand.u32 2147483647, %v456
        %v681 = vand.u32 %v680, 8388607
        %v682 = vor.u32 %v681, 8388608
        %v683 = vsub.s32 0, %v682
        %v684 = vadd.s32 %v679, 1
        %vm685 = vcmp.gt.s32.totalorder %v684, 0
        %v686 = vsel %vm685, %v684, 0
        %v687 = vshrl.u32 %v686, 5
        %v688 = vand.u32 %v686, 31
        %v689 = vsub.s32 32, %v688
        %v690 = vshrl.u32 683565275, %v689
        %v691 = vshll.u32 683565275, %v688
        %v692 = vshrl.u32 2475754826, %v689
        %v693 = vor.u32 %v691, %v692
        %v694 = vshll.u32 2475754826, %v688
        %v695 = vshrl.u32 2131351028, %v689
        %v696 = vor.u32 %v694, %v695
        %v697 = vshll.u32 2131351028, %v688
        %v698 = vshrl.u32 2102212464, %v689
        %v699 = vor.u32 %v697, %v698
        %v700 = vshll.u32 2102212464, %v688
        %v701 = vshrl.u32 920167782, %v689
        %v702 = vor.u32 %v700, %v701
        %v703 = vshll.u32 920167782, %v688
        %v704 = vshrl.u32 1326507024, %v689
        %v705 = vor.u32 %v703, %v704
        %vm706 = vcmp.lt.s32.totalorder %v687, 1
        %vm707 = vcmp.lt.s32.totalorder %v687, 2
        %vm708 = vcmp.lt.s32.totalorder %v687, 3
        %vm709 = vcmp.lt.s32.totalorder %v687, 4
        %v710 = vsel %vm706, %v690, %v693
        %v711 = vsel %vm709, %v699, 2102212464
        %v712 = vsel %vm708, %v696, %v711
        %v713 = vsel %vm707, %v710, %v712
        %v714 = vsel %vm706, %v693, %v696
        %v715 = vsel %vm709, %v702, 920167782
        %v716 = vsel %vm708, %v699, %v715
        %v717 = vsel %vm707, %v714, %v716
        %v718 = vsel %vm706, %v696, %v699
        %v719 = vsel %vm709, %v705, 1326507024
        %v720 = vsel %vm708, %v702, %v719
        %v721 = vsel %vm707, %v718, %v720
        %v722 = vshll.u32 %v682, 8
        %v723 = vmul.u32.u64.compose %v722, %v721
        %v724 = vextract.low.u32 %v723
        %v725 = vextract.high.u32 %v723
        %v726 = vmul.u32.u64.compose %v722, %v717
        %v727 = vextract.low.u32 %v726
        %v728 = vextract.high.u32 %v726
        %v729 = vmul.u32 %v722, %v713
        %v730 = vadd.s32 %v725, %v727
        %vm731 = vc.u32 %v725, %v727
        %v732 = vadd.s32 %v728, 1
        %v733 = vsel %vm731, %v732, %v728
        %v734 = vadd.s32 %v729, %v733
        %v735 = vadd.s32 %v734, 536870912
        %v736 = vshrl.u32 %v735, 30
        %v737 = vshll.u32 %v736, 30
        %v738 = vsub.s32 %v734, %v737
        %vm739 = vcmp.lt.s32.totalorder %v738, 0
        %v740 = vsub.s32 0, %v738
        %v741 = vsel %vm739, %v740, %v738
        %v742 = vclz %v741
        %v743 = vsub.s32 %v742, 2
        %vm744 = vcmp.gt.s32.totalorder 0, %v743
        %v745 = vsel %vm744, 0, %v743
        %v746 = vsub.s32 32, %v745
        %v747 = vshll.u32 %v738, %v745
        %v748 = vshrl.u32 %v730, %v746
        %v749 = vor.u32 %v747, %v748
        %v750 = vsub.s32 4294967266, %v745
        %v751 = vadd.s32 %v750, 127
        %v752 = vshll.u32 %v751, 23
        %v753 = vor.u32 4788187, %v752
        %v754 = vand.u32 2147483647, %v753
        %v756 = vcvt.s32.f32 %v749
        %v757 = vmul.f32 %v756, %v754
        %v758 = vxor.u32 %v757, 2147483648
        %v759 = vsel %vm676, %v758, %v757
        %v760 = vsub.s32 4, %v736
        %v761 = vsel %vm676, %v760, %v736
        %v762 = vsel %vm675, %v456, %v759
        %v763 = vsel %vm675, 0, %v761
        %v764 = vcosq.f32.pop %v762
        %v765 = vsinq.f32.pop %v762
        %vm766 = vweird.f32 %v456
        %v767 = vadd.s32 %v763, 3
        %v768 = vand.u32 %v767, 3
        %vm769 = vcmp.lt.s32.totalorder %v768, 2
        %vm770 = vcmp.eq.s32.totalorder %v768, 0
        %v771 = vxor.u32 %v765, 2147483648
        %v772 = vsel %vm770, %v764, %v771
        %vm773 = vcmp.eq.s32.totalorder %v768, 2
        %v774 = vxor.u32 %v764, 2147483648
        %v775 = vsel %vm773, %v774, %v765
        %v776 = vsel %vm769, %v772, %v775
        %v777 = vsel %vm766, nan, %v776
        %v778 = vand.u32 2147483647, %v458
        %vm779 = vcmp.le.f32.partialorder %v778, 0.7853982
        %vm780 = vcmp.lt.s32.totalorder %v458, 0
        %v781 = vand.u32 %v458, 2139095040
        %v782 = vshrl.u32 %v781, 23
        %v783 = vsub.s32 %v782, 127
        %v784 = vand.u32 2147483647, %v458
        %v785 = vand.u32 %v784, 8388607
        %v786 = vor.u32 %v785, 8388608
        %v787 = vsub.s32 0, %v786
        %v788 = vadd.s32 %v783, 1
        %vm789 = vcmp.gt.s32.totalorder %v788, 0
        %v790 = vsel %vm789, %v788, 0
        %v791 = vshrl.u32 %v790, 5
        %v792 = vand.u32 %v790, 31
        %v793 = vsub.s32 32, %v792
        %v794 = vshrl.u32 683565275, %v793
        %v795 = vshll.u32 683565275, %v792
        %v796 = vshrl.u32 2475754826, %v793
        %v797 = vor.u32 %v795, %v796
        %v798 = vshll.u32 2475754826, %v792
        %v799 = vshrl.u32 2131351028, %v793
        %v800 = vor.u32 %v798, %v799
        %v801 = vshll.u32 2131351028, %v792
        %v802 = vshrl.u32 2102212464, %v793
        %v803 = vor.u32 %v801, %v802
        %v804 = vshll.u32 2102212464, %v792
        %v805 = vshrl.u32 920167782, %v793
        %v806 = vor.u32 %v804, %v805
        %v807 = vshll.u32 920167782, %v792
        %v808 = vshrl.u32 1326507024, %v793
        %v809 = vor.u32 %v807, %v808
        %vm810 = vcmp.lt.s32.totalorder %v791, 1
        %vm811 = vcmp.lt.s32.totalorder %v791, 2
        %vm812 = vcmp.lt.s32.totalorder %v791, 3
        %vm813 = vcmp.lt.s32.totalorder %v791, 4
        %v814 = vsel %vm810, %v794, %v797
        %v815 = vsel %vm813, %v803, 2102212464
        %v816 = vsel %vm812, %v800, %v815
        %v817 = vsel %vm811, %v814, %v816
        %v818 = vsel %vm810, %v797, %v800
        %v819 = vsel %vm813, %v806, 920167782
        %v820 = vsel %vm812, %v803, %v819
        %v821 = vsel %vm811, %v818, %v820
        %v822 = vsel %vm810, %v800, %v803
        %v823 = vsel %vm813, %v809, 1326507024
        %v824 = vsel %vm812, %v806, %v823
        %v825 = vsel %vm811, %v822, %v824
        %v826 = vshll.u32 %v786, 8
        %v827 = vmul.u32.u64.compose %v826, %v825
        %v828 = vextract.low.u32 %v827
        %v829 = vextract.high.u32 %v827
        %v830 = vmul.u32.u64.compose %v826, %v821
        %v831 = vextract.low.u32 %v830
        %v832 = vextract.high.u32 %v830
        %v833 = vmul.u32 %v826, %v817
        %v834 = vadd.s32 %v829, %v831
        %vm835 = vc.u32 %v829, %v831
        %v836 = vadd.s32 %v832, 1
        %v837 = vsel %vm835, %v836, %v832
        %v838 = vadd.s32 %v833, %v837
        %v839 = vadd.s32 %v838, 536870912
        %v840 = vshrl.u32 %v839, 30
        %v841 = vshll.u32 %v840, 30
        %v842 = vsub.s32 %v838, %v841
        %vm843 = vcmp.lt.s32.totalorder %v842, 0
        %v844 = vsub.s32 0, %v842
        %v845 = vsel %vm843, %v844, %v842
        %v846 = vclz %v845
        %v847 = vsub.s32 %v846, 2
        %vm848 = vcmp.gt.s32.totalorder 0, %v847
        %v849 = vsel %vm848, 0, %v847
        %v850 = vsub.s32 32, %v849
        %v851 = vshll.u32 %v842, %v849
        %v852 = vshrl.u32 %v834, %v850
        %v853 = vor.u32 %v851, %v852
        %v854 = vsub.s32 4294967266, %v849
        %v855 = vadd.s32 %v854, 127
        %v856 = vshll.u32 %v855, 23
        %v857 = vor.u32 4788187, %v856
        %v858 = vand.u32 2147483647, %v857
        %v860 = vcvt.s32.f32 %v853
        %v861 = vmul.f32 %v860, %v858
        %v862 = vxor.u32 %v861, 2147483648
        %v863 = vsel %vm780, %v862, %v861
        %v864 = vsub.s32 4, %v840
        %v865 = vsel %vm780, %v864, %v840
        %v866 = vsel %vm779, %v458, %v863
        %v867 = vsel %vm779, 0, %v865
        %v868 = vcosq.f32.pop %v866
        %v869 = vsinq.f32.pop %v866
        %vm870 = vweird.f32 %v458
        %v871 = vadd.s32 %v867, 3
        %v872 = vand.u32 %v871, 3
        %vm873 = vcmp.lt.s32.totalorder %v872, 2
        %vm874 = vcmp.eq.s32.totalorder %v872, 0
        %v875 = vxor.u32 %v869, 2147483648
        %v876 = vsel %vm874, %v868, %v875
        %vm877 = vcmp.eq.s32.totalorder %v872, 2
        %v878 = vxor.u32 %v868, 2147483648
        %v879 = vsel %vm877, %v878, %v869
        %v880 = vsel %vm873, %v876, %v879
        %v881 = vsel %vm870, nan, %v880
        %v882 = vand.u32 2147483647, %v462
        %vm883 = vcmp.le.f32.partialorder %v882, 0.7853982
        %vm884 = vcmp.lt.s32.totalorder %v462, 0
        %v885 = vand.u32 %v462, 2139095040
        %v886 = vshrl.u32 %v885, 23
        %v887 = vsub.s32 %v886, 127
        %v888 = vand.u32 2147483647, %v462
        %v889 = vand.u32 %v888, 8388607
        %v890 = vor.u32 %v889, 8388608
        %v891 = vsub.s32 0, %v890
        %v892 = vadd.s32 %v887, 1
        %vm893 = vcmp.gt.s32.totalorder %v892, 0
        %v894 = vsel %vm893, %v892, 0
        %v895 = vshrl.u32 %v894, 5
        %v896 = vand.u32 %v894, 31
        %v897 = vsub.s32 32, %v896
        %v898 = vshrl.u32 683565275, %v897
        %v899 = vshll.u32 683565275, %v896
        %v900 = vshrl.u32 2475754826, %v897
        %v901 = vor.u32 %v899, %v900
        %v902 = vshll.u32 2475754826, %v896
        %v903 = vshrl.u32 2131351028, %v897
        %v904 = vor.u32 %v902, %v903
        %v905 = vshll.u32 2131351028, %v896
        %v906 = vshrl.u32 2102212464, %v897
        %v907 = vor.u32 %v905, %v906
        %v908 = vshll.u32 2102212464, %v896
        %v909 = vshrl.u32 920167782, %v897
        %v910 = vor.u32 %v908, %v909
        %v911 = vshll.u32 920167782, %v896
        %v912 = vshrl.u32 1326507024, %v897
        %v913 = vor.u32 %v911, %v912
        %vm914 = vcmp.lt.s32.totalorder %v895, 1
        %vm915 = vcmp.lt.s32.totalorder %v895, 2
        %vm916 = vcmp.lt.s32.totalorder %v895, 3
        %vm917 = vcmp.lt.s32.totalorder %v895, 4
        %v918 = vsel %vm914, %v898, %v901
        %v919 = vsel %vm917, %v907, 2102212464
        %v920 = vsel %vm916, %v904, %v919
        %v921 = vsel %vm915, %v918, %v920
        %v922 = vsel %vm914, %v901, %v904
        %v923 = vsel %vm917, %v910, 920167782
        %v924 = vsel %vm916, %v907, %v923
        %v925 = vsel %vm915, %v922, %v924
        %v926 = vsel %vm914, %v904, %v907
        %v927 = vsel %vm917, %v913, 1326507024
        %v928 = vsel %vm916, %v910, %v927
        %v929 = vsel %vm915, %v926, %v928
        %v930 = vshll.u32 %v890, 8
        %v931 = vmul.u32.u64.compose %v930, %v929
        %v932 = vextract.low.u32 %v931
        %v933 = vextract.high.u32 %v931
        %v934 = vmul.u32.u64.compose %v930, %v925
        %v935 = vextract.low.u32 %v934
        %v936 = vextract.high.u32 %v934
        %v937 = vmul.u32 %v930, %v921
        %v938 = vadd.s32 %v933, %v935
        %vm939 = vc.u32 %v933, %v935
        %v940 = vadd.s32 %v936, 1
        %v941 = vsel %vm939, %v940, %v936
        %v942 = vadd.s32 %v937, %v941
        %v943 = vadd.s32 %v942, 536870912
        %v944 = vshrl.u32 %v943, 30
        %v945 = vshll.u32 %v944, 30
        %v946 = vsub.s32 %v942, %v945
        %vm947 = vcmp.lt.s32.totalorder %v946, 0
        %v948 = vsub.s32 0, %v946
        %v949 = vsel %vm947, %v948, %v946
        %v950 = vclz %v949
        %v951 = vsub.s32 %v950, 2
        %vm952 = vcmp.gt.s32.totalorder 0, %v951
        %v953 = vsel %vm952, 0, %v951
        %v954 = vsub.s32 32, %v953
        %v955 = vshll.u32 %v946, %v953
        %v956 = vshrl.u32 %v938, %v954
        %v957 = vor.u32 %v955, %v956
        %v958 = vsub.s32 4294967266, %v953
        %v959 = vadd.s32 %v958, 127
        %v960 = vshll.u32 %v959, 23
        %v961 = vor.u32 4788187, %v960
        %v962 = vand.u32 2147483647, %v961
        %v964 = vcvt.s32.f32 %v957
        %v965 = vmul.f32 %v964, %v962
        %v966 = vxor.u32 %v965, 2147483648
        %v967 = vsel %vm884, %v966, %v965
        %v968 = vsub.s32 4, %v944
        %v969 = vsel %vm884, %v968, %v944
        %v970 = vsel %vm883, %v462, %v967
        %v971 = vsel %vm883, 0, %v969
        %v972 = vcosq.f32.pop %v970
        %v973 = vsinq.f32.pop %v970
        %vm974 = vweird.f32 %v462
        %v975 = vadd.s32 %v971, 3
        %v976 = vand.u32 %v975, 3
        %vm977 = vcmp.lt.s32.totalorder %v976, 2
        %vm978 = vcmp.eq.s32.totalorder %v976, 0
        %v979 = vxor.u32 %v973, 2147483648
        %v980 = vsel %vm978, %v972, %v979
        %vm981 = vcmp.eq.s32.totalorder %v976, 2
        %v982 = vxor.u32 %v972, 2147483648
        %v983 = vsel %vm981, %v982, %v973
        %v984 = vsel %vm977, %v980, %v983
        %v985 = vsel %vm974, nan, %v984
        %v986 = vand.u32 2147483647, %v464
        %vm987 = vcmp.le.f32.partialorder %v986, 0.7853982
        %vm988 = vcmp.lt.s32.totalorder %v464, 0
        %v989 = vand.u32 %v464, 2139095040
        %v990 = vshrl.u32 %v989, 23
        %v991 = vsub.s32 %v990, 127
        %v992 = vand.u32 2147483647, %v464
        %v993 = vand.u32 %v992, 8388607
        %v994 = vor.u32 %v993, 8388608
        %v995 = vsub.s32 0, %v994
        %v996 = vadd.s32 %v991, 1
        %vm997 = vcmp.gt.s32.totalorder %v996, 0
        %v998 = vsel %vm997, %v996, 0
        %v999 = vshrl.u32 %v998, 5
        %v1000 = vand.u32 %v998, 31
        %v1001 = vsub.s32 32, %v1000
        %v1002 = vshrl.u32 683565275, %v1001
        %v1003 = vshll.u32 683565275, %v1000
        %v1004 = vshrl.u32 2475754826, %v1001
        %v1005 = vor.u32 %v1003, %v1004
        %v1006 = vshll.u32 2475754826, %v1000
        %v1007 = vshrl.u32 2131351028, %v1001
        %v1008 = vor.u32 %v1006, %v1007
        %v1009 = vshll.u32 2131351028, %v1000
        %v1010 = vshrl.u32 2102212464, %v1001
        %v1011 = vor.u32 %v1009, %v1010
        %v1012 = vshll.u32 2102212464, %v1000
        %v1013 = vshrl.u32 920167782, %v1001
        %v1014 = vor.u32 %v1012, %v1013
        %v1015 = vshll.u32 920167782, %v1000
        %v1016 = vshrl.u32 1326507024, %v1001
        %v1017 = vor.u32 %v1015, %v1016
        %vm1018 = vcmp.lt.s32.totalorder %v999, 1
        %vm1019 = vcmp.lt.s32.totalorder %v999, 2
        %vm1020 = vcmp.lt.s32.totalorder %v999, 3
        %vm1021 = vcmp.lt.s32.totalorder %v999, 4
        %v1022 = vsel %vm1018, %v1002, %v1005
        %v1023 = vsel %vm1021, %v1011, 2102212464
        %v1024 = vsel %vm1020, %v1008, %v1023
        %v1025 = vsel %vm1019, %v1022, %v1024
        %v1026 = vsel %vm1018, %v1005, %v1008
        %v1027 = vsel %vm1021, %v1014, 920167782
        %v1028 = vsel %vm1020, %v1011, %v1027
        %v1029 = vsel %vm1019, %v1026, %v1028
        %v1030 = vsel %vm1018, %v1008, %v1011
        %v1031 = vsel %vm1021, %v1017, 1326507024
        %v1032 = vsel %vm1020, %v1014, %v1031
        %v1033 = vsel %vm1019, %v1030, %v1032
        %v1034 = vshll.u32 %v994, 8
        %v1035 = vmul.u32.u64.compose %v1034, %v1033
        %v1036 = vextract.low.u32 %v1035
        %v1037 = vextract.high.u32 %v1035
        %v1038 = vmul.u32.u64.compose %v1034, %v1029
        %v1039 = vextract.low.u32 %v1038
        %v1040 = vextract.high.u32 %v1038
        %v1041 = vmul.u32 %v1034, %v1025
        %v1042 = vadd.s32 %v1037, %v1039
        %vm1043 = vc.u32 %v1037, %v1039
        %v1044 = vadd.s32 %v1040, 1
        %v1045 = vsel %vm1043, %v1044, %v1040
        %v1046 = vadd.s32 %v1041, %v1045
        %v1047 = vadd.s32 %v1046, 536870912
        %v1048 = vshrl.u32 %v1047, 30
        %v1049 = vshll.u32 %v1048, 30
        %v1050 = vsub.s32 %v1046, %v1049
        %vm1051 = vcmp.lt.s32.totalorder %v1050, 0
        %v1052 = vsub.s32 0, %v1050
        %v1053 = vsel %vm1051, %v1052, %v1050
        %v1054 = vclz %v1053
        %v1055 = vsub.s32 %v1054, 2
        %vm1056 = vcmp.gt.s32.totalorder 0, %v1055
        %v1057 = vsel %vm1056, 0, %v1055
        %v1058 = vsub.s32 32, %v1057
        %v1059 = vshll.u32 %v1050, %v1057
        %v1060 = vshrl.u32 %v1042, %v1058
        %v1061 = vor.u32 %v1059, %v1060
        %v1062 = vsub.s32 4294967266, %v1057
        %v1063 = vadd.s32 %v1062, 127
        %v1064 = vshll.u32 %v1063, 23
        %v1065 = vor.u32 4788187, %v1064
        %v1066 = vand.u32 2147483647, %v1065
        %v1068 = vcvt.s32.f32 %v1061
        %v1069 = vmul.f32 %v1068, %v1066
        %v1070 = vxor.u32 %v1069, 2147483648
        %v1071 = vsel %vm988, %v1070, %v1069
        %v1072 = vsub.s32 4, %v1048
        %v1073 = vsel %vm988, %v1072, %v1048
        %v1074 = vsel %vm987, %v464, %v1071
        %v1075 = vsel %vm987, 0, %v1073
        %v1076 = vcosq.f32.pop %v1074
        %v1077 = vsinq.f32.pop %v1074
        %vm1078 = vweird.f32 %v464
        %v1079 = vadd.s32 %v1075, 3
        %v1080 = vand.u32 %v1079, 3
        %vm1081 = vcmp.lt.s32.totalorder %v1080, 2
        %vm1082 = vcmp.eq.s32.totalorder %v1080, 0
        %v1083 = vxor.u32 %v1077, 2147483648
        %v1084 = vsel %vm1082, %v1076, %v1083
        %vm1085 = vcmp.eq.s32.totalorder %v1080, 2
        %v1086 = vxor.u32 %v1076, 2147483648
        %v1087 = vsel %vm1085, %v1086, %v1077
        %v1088 = vsel %vm1081, %v1084, %v1087
        %v1089 = vsel %vm1078, nan, %v1088
        %v1090 = vpack.c.bf16 %v777, %v569
        %v1091 = vpack.c.bf16 %v881, %v673
        %v1092 = vpack.c.bf16 %v985, %v985
        %v1093 = vpack.c.bf16 %v1089, %v1089
        %v1094 = vand.u32 2147483647, %v450
        %vm1095 = vcmp.le.f32.partialorder %v1094, 0.7853982
        %vm1096 = vcmp.lt.s32.totalorder %v450, 0
        %v1097 = vand.u32 %v450, 2139095040
        %v1098 = vshrl.u32 %v1097, 23
        %v1099 = vsub.s32 %v1098, 127
        %v1100 = vand.u32 2147483647, %v450
        %v1101 = vand.u32 %v1100, 8388607
        %v1102 = vor.u32 %v1101, 8388608
        %v1103 = vsub.s32 0, %v1102
        %v1104 = vadd.s32 %v1099, 1
        %vm1105 = vcmp.gt.s32.totalorder %v1104, 0
        %v1106 = vsel %vm1105, %v1104, 0
        %v1107 = vshrl.u32 %v1106, 5
        %v1108 = vand.u32 %v1106, 31
        %v1109 = vsub.s32 32, %v1108
        %v1110 = vshrl.u32 683565275, %v1109
        %v1111 = vshll.u32 683565275, %v1108
        %v1112 = vshrl.u32 2475754826, %v1109
        %v1113 = vor.u32 %v1111, %v1112
        %v1114 = vshll.u32 2475754826, %v1108
        %v1115 = vshrl.u32 2131351028, %v1109
        %v1116 = vor.u32 %v1114, %v1115
        %v1117 = vshll.u32 2131351028, %v1108
        %v1118 = vshrl.u32 2102212464, %v1109
        %v1119 = vor.u32 %v1117, %v1118
        %v1120 = vshll.u32 2102212464, %v1108
        %v1121 = vshrl.u32 920167782, %v1109
        %v1122 = vor.u32 %v1120, %v1121
        %v1123 = vshll.u32 920167782, %v1108
        %v1124 = vshrl.u32 1326507024, %v1109
        %v1125 = vor.u32 %v1123, %v1124
        %vm1126 = vcmp.lt.s32.totalorder %v1107, 1
        %vm1127 = vcmp.lt.s32.totalorder %v1107, 2
        %vm1128 = vcmp.lt.s32.totalorder %v1107, 3
        %vm1129 = vcmp.lt.s32.totalorder %v1107, 4
        %v1130 = vsel %vm1126, %v1110, %v1113
        %v1131 = vsel %vm1129, %v1119, 2102212464
        %v1132 = vsel %vm1128, %v1116, %v1131
        %v1133 = vsel %vm1127, %v1130, %v1132
        %v1134 = vsel %vm1126, %v1113, %v1116
        %v1135 = vsel %vm1129, %v1122, 920167782
        %v1136 = vsel %vm1128, %v1119, %v1135
        %v1137 = vsel %vm1127, %v1134, %v1136
        %v1138 = vsel %vm1126, %v1116, %v1119
        %v1139 = vsel %vm1129, %v1125, 1326507024
        %v1140 = vsel %vm1128, %v1122, %v1139
        %v1141 = vsel %vm1127, %v1138, %v1140
        %v1142 = vshll.u32 %v1102, 8
        %v1143 = vmul.u32.u64.compose %v1142, %v1141
        %v1144 = vextract.low.u32 %v1143
        %v1145 = vextract.high.u32 %v1143
        %v1146 = vmul.u32.u64.compose %v1142, %v1137
        %v1147 = vextract.low.u32 %v1146
        %v1148 = vextract.high.u32 %v1146
        %v1149 = vmul.u32 %v1142, %v1133
        %v1150 = vadd.s32 %v1145, %v1147
        %vm1151 = vc.u32 %v1145, %v1147
        %v1152 = vadd.s32 %v1148, 1
        %v1153 = vsel %vm1151, %v1152, %v1148
        %v1154 = vadd.s32 %v1149, %v1153
        %v1155 = vadd.s32 %v1154, 536870912
        %v1156 = vshrl.u32 %v1155, 30
        %v1157 = vshll.u32 %v1156, 30
        %v1158 = vsub.s32 %v1154, %v1157
        %vm1159 = vcmp.lt.s32.totalorder %v1158, 0
        %v1160 = vsub.s32 0, %v1158
        %v1161 = vsel %vm1159, %v1160, %v1158
        %v1162 = vclz %v1161
        %v1163 = vsub.s32 %v1162, 2
        %vm1164 = vcmp.gt.s32.totalorder 0, %v1163
        %v1165 = vsel %vm1164, 0, %v1163
        %v1166 = vsub.s32 32, %v1165
        %v1167 = vshll.u32 %v1158, %v1165
        %v1168 = vshrl.u32 %v1150, %v1166
        %v1169 = vor.u32 %v1167, %v1168
        %v1170 = vsub.s32 4294967266, %v1165
        %v1171 = vadd.s32 %v1170, 127
        %v1172 = vshll.u32 %v1171, 23
        %v1173 = vor.u32 4788187, %v1172
        %v1174 = vand.u32 2147483647, %v1173
        %v1176 = vcvt.s32.f32 %v1169
        %v1177 = vmul.f32 %v1176, %v1174
        %v1178 = vxor.u32 %v1177, 2147483648
        %v1179 = vsel %vm1096, %v1178, %v1177
        %v1180 = vsub.s32 4, %v1156
        %v1181 = vsel %vm1096, %v1180, %v1156
        %v1182 = vsel %vm1095, %v450, %v1179
        %v1183 = vsel %vm1095, 0, %v1181
        %v1184 = vcosq.f32.pop %v1182
        %v1185 = vsinq.f32.pop %v1182
        %vm1186 = vweird.f32 %v450
        %v1187 = vand.u32 %v1183, 3
        %vm1188 = vcmp.lt.s32.totalorder %v1187, 2
        %vm1189 = vcmp.eq.s32.totalorder %v1187, 0
        %v1190 = vxor.u32 %v1185, 2147483648
        %v1191 = vsel %vm1189, %v1184, %v1190
        %vm1192 = vcmp.eq.s32.totalorder %v1187, 2
        %v1193 = vxor.u32 %v1184, 2147483648
        %v1194 = vsel %vm1192, %v1193, %v1185
        %v1195 = vsel %vm1188, %v1191, %v1194
        %v1196 = vsel %vm1186, nan, %v1195
        %v1197 = vand.u32 2147483647, %v452
        %vm1198 = vcmp.le.f32.partialorder %v1197, 0.7853982
        %vm1199 = vcmp.lt.s32.totalorder %v452, 0
        %v1200 = vand.u32 %v452, 2139095040
        %v1201 = vshrl.u32 %v1200, 23
        %v1202 = vsub.s32 %v1201, 127
        %v1203 = vand.u32 2147483647, %v452
        %v1204 = vand.u32 %v1203, 8388607
        %v1205 = vor.u32 %v1204, 8388608
        %v1206 = vsub.s32 0, %v1205
        %v1207 = vadd.s32 %v1202, 1
        %vm1208 = vcmp.gt.s32.totalorder %v1207, 0
        %v1209 = vsel %vm1208, %v1207, 0
        %v1210 = vshrl.u32 %v1209, 5
        %v1211 = vand.u32 %v1209, 31
        %v1212 = vsub.s32 32, %v1211
        %v1213 = vshrl.u32 683565275, %v1212
        %v1214 = vshll.u32 683565275, %v1211
        %v1215 = vshrl.u32 2475754826, %v1212
        %v1216 = vor.u32 %v1214, %v1215
        %v1217 = vshll.u32 2475754826, %v1211
        %v1218 = vshrl.u32 2131351028, %v1212
        %v1219 = vor.u32 %v1217, %v1218
        %v1220 = vshll.u32 2131351028, %v1211
        %v1221 = vshrl.u32 2102212464, %v1212
        %v1222 = vor.u32 %v1220, %v1221
        %v1223 = vshll.u32 2102212464, %v1211
        %v1224 = vshrl.u32 920167782, %v1212
        %v1225 = vor.u32 %v1223, %v1224
        %v1226 = vshll.u32 920167782, %v1211
        %v1227 = vshrl.u32 1326507024, %v1212
        %v1228 = vor.u32 %v1226, %v1227
        %vm1229 = vcmp.lt.s32.totalorder %v1210, 1
        %vm1230 = vcmp.lt.s32.totalorder %v1210, 2
        %vm1231 = vcmp.lt.s32.totalorder %v1210, 3
        %vm1232 = vcmp.lt.s32.totalorder %v1210, 4
        %v1233 = vsel %vm1229, %v1213, %v1216
        %v1234 = vsel %vm1232, %v1222, 2102212464
        %v1235 = vsel %vm1231, %v1219, %v1234
        %v1236 = vsel %vm1230, %v1233, %v1235
        %v1237 = vsel %vm1229, %v1216, %v1219
        %v1238 = vsel %vm1232, %v1225, 920167782
        %v1239 = vsel %vm1231, %v1222, %v1238
        %v1240 = vsel %vm1230, %v1237, %v1239
        %v1241 = vsel %vm1229, %v1219, %v1222
        %v1242 = vsel %vm1232, %v1228, 1326507024
        %v1243 = vsel %vm1231, %v1225, %v1242
        %v1244 = vsel %vm1230, %v1241, %v1243
        %v1245 = vshll.u32 %v1205, 8
        %v1246 = vmul.u32.u64.compose %v1245, %v1244
        %v1247 = vextract.low.u32 %v1246
        %v1248 = vextract.high.u32 %v1246
        %v1249 = vmul.u32.u64.compose %v1245, %v1240
        %v1250 = vextract.low.u32 %v1249
        %v1251 = vextract.high.u32 %v1249
        %v1252 = vmul.u32 %v1245, %v1236
        %v1253 = vadd.s32 %v1248, %v1250
        %vm1254 = vc.u32 %v1248, %v1250
        %v1255 = vadd.s32 %v1251, 1
        %v1256 = vsel %vm1254, %v1255, %v1251
        %v1257 = vadd.s32 %v1252, %v1256
        %v1258 = vadd.s32 %v1257, 536870912
        %v1259 = vshrl.u32 %v1258, 30
        %v1260 = vshll.u32 %v1259, 30
        %v1261 = vsub.s32 %v1257, %v1260
        %vm1262 = vcmp.lt.s32.totalorder %v1261, 0
        %v1263 = vsub.s32 0, %v1261
        %v1264 = vsel %vm1262, %v1263, %v1261
        %v1265 = vclz %v1264
        %v1266 = vsub.s32 %v1265, 2
        %vm1267 = vcmp.gt.s32.totalorder 0, %v1266
        %v1268 = vsel %vm1267, 0, %v1266
        %v1269 = vsub.s32 32, %v1268
        %v1270 = vshll.u32 %v1261, %v1268
        %v1271 = vshrl.u32 %v1253, %v1269
        %v1272 = vor.u32 %v1270, %v1271
        %v1273 = vsub.s32 4294967266, %v1268
        %v1274 = vadd.s32 %v1273, 127
        %v1275 = vshll.u32 %v1274, 23
        %v1276 = vor.u32 4788187, %v1275
        %v1277 = vand.u32 2147483647, %v1276
        %v1279 = vcvt.s32.f32 %v1272
        %v1280 = vmul.f32 %v1279, %v1277
        %v1281 = vxor.u32 %v1280, 2147483648
        %v1282 = vsel %vm1199, %v1281, %v1280
        %v1283 = vsub.s32 4, %v1259
        %v1284 = vsel %vm1199, %v1283, %v1259
        %v1285 = vsel %vm1198, %v452, %v1282
        %v1286 = vsel %vm1198, 0, %v1284
        %v1287 = vcosq.f32.pop %v1285
        %v1288 = vsinq.f32.pop %v1285
        %vm1289 = vweird.f32 %v452
        %v1290 = vand.u32 %v1286, 3
        %vm1291 = vcmp.lt.s32.totalorder %v1290, 2
        %vm1292 = vcmp.eq.s32.totalorder %v1290, 0
        %v1293 = vxor.u32 %v1288, 2147483648
        %v1294 = vsel %vm1292, %v1287, %v1293
        %vm1295 = vcmp.eq.s32.totalorder %v1290, 2
        %v1296 = vxor.u32 %v1287, 2147483648
        %v1297 = vsel %vm1295, %v1296, %v1288
        %v1298 = vsel %vm1291, %v1294, %v1297
        %v1299 = vsel %vm1289, nan, %v1298
        %v1300 = vand.u32 2147483647, %v456
        %vm1301 = vcmp.le.f32.partialorder %v1300, 0.7853982
        %vm1302 = vcmp.lt.s32.totalorder %v456, 0
        %v1303 = vand.u32 %v456, 2139095040
        %v1304 = vshrl.u32 %v1303, 23
        %v1305 = vsub.s32 %v1304, 127
        %v1306 = vand.u32 2147483647, %v456
        %v1307 = vand.u32 %v1306, 8388607
        %v1308 = vor.u32 %v1307, 8388608
        %v1309 = vsub.s32 0, %v1308
        %v1310 = vadd.s32 %v1305, 1
        %vm1311 = vcmp.gt.s32.totalorder %v1310, 0
        %v1312 = vsel %vm1311, %v1310, 0
        %v1313 = vshrl.u32 %v1312, 5
        %v1314 = vand.u32 %v1312, 31
        %v1315 = vsub.s32 32, %v1314
        %v1316 = vshrl.u32 683565275, %v1315
        %v1317 = vshll.u32 683565275, %v1314
        %v1318 = vshrl.u32 2475754826, %v1315
        %v1319 = vor.u32 %v1317, %v1318
        %v1320 = vshll.u32 2475754826, %v1314
        %v1321 = vshrl.u32 2131351028, %v1315
        %v1322 = vor.u32 %v1320, %v1321
        %v1323 = vshll.u32 2131351028, %v1314
        %v1324 = vshrl.u32 2102212464, %v1315
        %v1325 = vor.u32 %v1323, %v1324
        %v1326 = vshll.u32 2102212464, %v1314
        %v1327 = vshrl.u32 920167782, %v1315
        %v1328 = vor.u32 %v1326, %v1327
        %v1329 = vshll.u32 920167782, %v1314
        %v1330 = vshrl.u32 1326507024, %v1315
        %v1331 = vor.u32 %v1329, %v1330
        %vm1332 = vcmp.lt.s32.totalorder %v1313, 1
        %vm1333 = vcmp.lt.s32.totalorder %v1313, 2
        %vm1334 = vcmp.lt.s32.totalorder %v1313, 3
        %vm1335 = vcmp.lt.s32.totalorder %v1313, 4
        %v1336 = vsel %vm1332, %v1316, %v1319
        %v1337 = vsel %vm1335, %v1325, 2102212464
        %v1338 = vsel %vm1334, %v1322, %v1337
        %v1339 = vsel %vm1333, %v1336, %v1338
        %v1340 = vsel %vm1332, %v1319, %v1322
        %v1341 = vsel %vm1335, %v1328, 920167782
        %v1342 = vsel %vm1334, %v1325, %v1341
        %v1343 = vsel %vm1333, %v1340, %v1342
        %v1344 = vsel %vm1332, %v1322, %v1325
        %v1345 = vsel %vm1335, %v1331, 1326507024
        %v1346 = vsel %vm1334, %v1328, %v1345
        %v1347 = vsel %vm1333, %v1344, %v1346
        %v1348 = vshll.u32 %v1308, 8
        %v1349 = vmul.u32.u64.compose %v1348, %v1347
        %v1350 = vextract.low.u32 %v1349
        %v1351 = vextract.high.u32 %v1349
        %v1352 = vmul.u32.u64.compose %v1348, %v1343
        %v1353 = vextract.low.u32 %v1352
        %v1354 = vextract.high.u32 %v1352
        %v1355 = vmul.u32 %v1348, %v1339
        %v1356 = vadd.s32 %v1351, %v1353
        %vm1357 = vc.u32 %v1351, %v1353
        %v1358 = vadd.s32 %v1354, 1
        %v1359 = vsel %vm1357, %v1358, %v1354
        %v1360 = vadd.s32 %v1355, %v1359
        %v1361 = vadd.s32 %v1360, 536870912
        %v1362 = vshrl.u32 %v1361, 30
        %v1363 = vshll.u32 %v1362, 30
        %v1364 = vsub.s32 %v1360, %v1363
        %vm1365 = vcmp.lt.s32.totalorder %v1364, 0
        %v1366 = vsub.s32 0, %v1364
        %v1367 = vsel %vm1365, %v1366, %v1364
        %v1368 = vclz %v1367
        %v1369 = vsub.s32 %v1368, 2
        %vm1370 = vcmp.gt.s32.totalorder 0, %v1369
        %v1371 = vsel %vm1370, 0, %v1369
        %v1372 = vsub.s32 32, %v1371
        %v1373 = vshll.u32 %v1364, %v1371
        %v1374 = vshrl.u32 %v1356, %v1372
        %v1375 = vor.u32 %v1373, %v1374
        %v1376 = vsub.s32 4294967266, %v1371
        %v1377 = vadd.s32 %v1376, 127
        %v1378 = vshll.u32 %v1377, 23
        %v1379 = vor.u32 4788187, %v1378
        %v1380 = vand.u32 2147483647, %v1379
        %v1382 = vcvt.s32.f32 %v1375
        %v1383 = vmul.f32 %v1382, %v1380
        %v1384 = vxor.u32 %v1383, 2147483648
        %v1385 = vsel %vm1302, %v1384, %v1383
        %v1386 = vsub.s32 4, %v1362
        %v1387 = vsel %vm1302, %v1386, %v1362
        %v1388 = vsel %vm1301, %v456, %v1385
        %v1389 = vsel %vm1301, 0, %v1387
        %v1390 = vcosq.f32.pop %v1388
        %v1391 = vsinq.f32.pop %v1388
        %vm1392 = vweird.f32 %v456
        %v1393 = vand.u32 %v1389, 3
        %vm1394 = vcmp.lt.s32.totalorder %v1393, 2
        %vm1395 = vcmp.eq.s32.totalorder %v1393, 0
        %v1396 = vxor.u32 %v1391, 2147483648
        %v1397 = vsel %vm1395, %v1390, %v1396
        %vm1398 = vcmp.eq.s32.totalorder %v1393, 2
        %v1399 = vxor.u32 %v1390, 2147483648
        %v1400 = vsel %vm1398, %v1399, %v1391
        %v1401 = vsel %vm1394, %v1397, %v1400
        %v1402 = vsel %vm1392, nan, %v1401
        %v1403 = vand.u32 2147483647, %v458
        %vm1404 = vcmp.le.f32.partialorder %v1403, 0.7853982
        %vm1405 = vcmp.lt.s32.totalorder %v458, 0
        %v1406 = vand.u32 %v458, 2139095040
        %v1407 = vshrl.u32 %v1406, 23
        %v1408 = vsub.s32 %v1407, 127
        %v1409 = vand.u32 2147483647, %v458
        %v1410 = vand.u32 %v1409, 8388607
        %v1411 = vor.u32 %v1410, 8388608
        %v1412 = vsub.s32 0, %v1411
        %v1413 = vadd.s32 %v1408, 1
        %vm1414 = vcmp.gt.s32.totalorder %v1413, 0
        %v1415 = vsel %vm1414, %v1413, 0
        %v1416 = vshrl.u32 %v1415, 5
        %v1417 = vand.u32 %v1415, 31
        %v1418 = vsub.s32 32, %v1417
        %v1419 = vshrl.u32 683565275, %v1418
        %v1420 = vshll.u32 683565275, %v1417
        %v1421 = vshrl.u32 2475754826, %v1418
        %v1422 = vor.u32 %v1420, %v1421
        %v1423 = vshll.u32 2475754826, %v1417
        %v1424 = vshrl.u32 2131351028, %v1418
        %v1425 = vor.u32 %v1423, %v1424
        %v1426 = vshll.u32 2131351028, %v1417
        %v1427 = vshrl.u32 2102212464, %v1418
        %v1428 = vor.u32 %v1426, %v1427
        %v1429 = vshll.u32 2102212464, %v1417
        %v1430 = vshrl.u32 920167782, %v1418
        %v1431 = vor.u32 %v1429, %v1430
        %v1432 = vshll.u32 920167782, %v1417
        %v1433 = vshrl.u32 1326507024, %v1418
        %v1434 = vor.u32 %v1432, %v1433
        %vm1435 = vcmp.lt.s32.totalorder %v1416, 1
        %vm1436 = vcmp.lt.s32.totalorder %v1416, 2
        %vm1437 = vcmp.lt.s32.totalorder %v1416, 3
        %vm1438 = vcmp.lt.s32.totalorder %v1416, 4
        %v1439 = vsel %vm1435, %v1419, %v1422
        %v1440 = vsel %vm1438, %v1428, 2102212464
        %v1441 = vsel %vm1437, %v1425, %v1440
        %v1442 = vsel %vm1436, %v1439, %v1441
        %v1443 = vsel %vm1435, %v1422, %v1425
        %v1444 = vsel %vm1438, %v1431, 920167782
        %v1445 = vsel %vm1437, %v1428, %v1444
        %v1446 = vsel %vm1436, %v1443, %v1445
        %v1447 = vsel %vm1435, %v1425, %v1428
        %v1448 = vsel %vm1438, %v1434, 1326507024
        %v1449 = vsel %vm1437, %v1431, %v1448
        %v1450 = vsel %vm1436, %v1447, %v1449
        %v1451 = vshll.u32 %v1411, 8
        %v1452 = vmul.u32.u64.compose %v1451, %v1450
        %v1453 = vextract.low.u32 %v1452
        %v1454 = vextract.high.u32 %v1452
        %v1455 = vmul.u32.u64.compose %v1451, %v1446
        %v1456 = vextract.low.u32 %v1455
        %v1457 = vextract.high.u32 %v1455
        %v1458 = vmul.u32 %v1451, %v1442
        %v1459 = vadd.s32 %v1454, %v1456
        %vm1460 = vc.u32 %v1454, %v1456
        %v1461 = vadd.s32 %v1457, 1
        %v1462 = vsel %vm1460, %v1461, %v1457
        %v1463 = vadd.s32 %v1458, %v1462
        %v1464 = vadd.s32 %v1463, 536870912
        %v1465 = vshrl.u32 %v1464, 30
        %v1466 = vshll.u32 %v1465, 30
        %v1467 = vsub.s32 %v1463, %v1466
        %vm1468 = vcmp.lt.s32.totalorder %v1467, 0
        %v1469 = vsub.s32 0, %v1467
        %v1470 = vsel %vm1468, %v1469, %v1467
        %v1471 = vclz %v1470
        %v1472 = vsub.s32 %v1471, 2
        %vm1473 = vcmp.gt.s32.totalorder 0, %v1472
        %v1474 = vsel %vm1473, 0, %v1472
        %v1475 = vsub.s32 32, %v1474
        %v1476 = vshll.u32 %v1467, %v1474
        %v1477 = vshrl.u32 %v1459, %v1475
        %v1478 = vor.u32 %v1476, %v1477
        %v1479 = vsub.s32 4294967266, %v1474
        %v1480 = vadd.s32 %v1479, 127
        %v1481 = vshll.u32 %v1480, 23
        %v1482 = vor.u32 4788187, %v1481
        %v1483 = vand.u32 2147483647, %v1482
        %v1485 = vcvt.s32.f32 %v1478
        %v1486 = vmul.f32 %v1485, %v1483
        %v1487 = vxor.u32 %v1486, 2147483648
        %v1488 = vsel %vm1405, %v1487, %v1486
        %v1489 = vsub.s32 4, %v1465
        %v1490 = vsel %vm1405, %v1489, %v1465
        %v1491 = vsel %vm1404, %v458, %v1488
        %v1492 = vsel %vm1404, 0, %v1490
        %v1493 = vcosq.f32.pop %v1491
        %v1494 = vsinq.f32.pop %v1491
        %vm1495 = vweird.f32 %v458
        %v1496 = vand.u32 %v1492, 3
        %vm1497 = vcmp.lt.s32.totalorder %v1496, 2
        %vm1498 = vcmp.eq.s32.totalorder %v1496, 0
        %v1499 = vxor.u32 %v1494, 2147483648
        %v1500 = vsel %vm1498, %v1493, %v1499
        %vm1501 = vcmp.eq.s32.totalorder %v1496, 2
        %v1502 = vxor.u32 %v1493, 2147483648
        %v1503 = vsel %vm1501, %v1502, %v1494
        %v1504 = vsel %vm1497, %v1500, %v1503
        %v1505 = vsel %vm1495, nan, %v1504
        %v1506 = vand.u32 2147483647, %v462
        %vm1507 = vcmp.le.f32.partialorder %v1506, 0.7853982
        %vm1508 = vcmp.lt.s32.totalorder %v462, 0
        %v1509 = vand.u32 %v462, 2139095040
        %v1510 = vshrl.u32 %v1509, 23
        %v1511 = vsub.s32 %v1510, 127
        %v1512 = vand.u32 2147483647, %v462
        %v1513 = vand.u32 %v1512, 8388607
        %v1514 = vor.u32 %v1513, 8388608
        %v1515 = vsub.s32 0, %v1514
        %v1516 = vadd.s32 %v1511, 1
        %vm1517 = vcmp.gt.s32.totalorder %v1516, 0
        %v1518 = vsel %vm1517, %v1516, 0
        %v1519 = vshrl.u32 %v1518, 5
        %v1520 = vand.u32 %v1518, 31
        %v1521 = vsub.s32 32, %v1520
        %v1522 = vshrl.u32 683565275, %v1521
        %v1523 = vshll.u32 683565275, %v1520
        %v1524 = vshrl.u32 2475754826, %v1521
        %v1525 = vor.u32 %v1523, %v1524
        %v1526 = vshll.u32 2475754826, %v1520
        %v1527 = vshrl.u32 2131351028, %v1521
        %v1528 = vor.u32 %v1526, %v1527
        %v1529 = vshll.u32 2131351028, %v1520
        %v1530 = vshrl.u32 2102212464, %v1521
        %v1531 = vor.u32 %v1529, %v1530
        %v1532 = vshll.u32 2102212464, %v1520
        %v1533 = vshrl.u32 920167782, %v1521
        %v1534 = vor.u32 %v1532, %v1533
        %v1535 = vshll.u32 920167782, %v1520
        %v1536 = vshrl.u32 1326507024, %v1521
        %v1537 = vor.u32 %v1535, %v1536
        %vm1538 = vcmp.lt.s32.totalorder %v1519, 1
        %vm1539 = vcmp.lt.s32.totalorder %v1519, 2
        %vm1540 = vcmp.lt.s32.totalorder %v1519, 3
        %vm1541 = vcmp.lt.s32.totalorder %v1519, 4
        %v1542 = vsel %vm1538, %v1522, %v1525
        %v1543 = vsel %vm1541, %v1531, 2102212464
        %v1544 = vsel %vm1540, %v1528, %v1543
        %v1545 = vsel %vm1539, %v1542, %v1544
        %v1546 = vsel %vm1538, %v1525, %v1528
        %v1547 = vsel %vm1541, %v1534, 920167782
        %v1548 = vsel %vm1540, %v1531, %v1547
        %v1549 = vsel %vm1539, %v1546, %v1548
        %v1550 = vsel %vm1538, %v1528, %v1531
        %v1551 = vsel %vm1541, %v1537, 1326507024
        %v1552 = vsel %vm1540, %v1534, %v1551
        %v1553 = vsel %vm1539, %v1550, %v1552
        %v1554 = vshll.u32 %v1514, 8
        %v1555 = vmul.u32.u64.compose %v1554, %v1553
        %v1556 = vextract.low.u32 %v1555
        %v1557 = vextract.high.u32 %v1555
        %v1558 = vmul.u32.u64.compose %v1554, %v1549
        %v1559 = vextract.low.u32 %v1558
        %v1560 = vextract.high.u32 %v1558
        %v1561 = vmul.u32 %v1554, %v1545
        %v1562 = vadd.s32 %v1557, %v1559
        %vm1563 = vc.u32 %v1557, %v1559
        %v1564 = vadd.s32 %v1560, 1
        %v1565 = vsel %vm1563, %v1564, %v1560
        %v1566 = vadd.s32 %v1561, %v1565
        %v1567 = vadd.s32 %v1566, 536870912
        %v1568 = vshrl.u32 %v1567, 30
        %v1569 = vshll.u32 %v1568, 30
        %v1570 = vsub.s32 %v1566, %v1569
        %vm1571 = vcmp.lt.s32.totalorder %v1570, 0
        %v1572 = vsub.s32 0, %v1570
        %v1573 = vsel %vm1571, %v1572, %v1570
        %v1574 = vclz %v1573
        %v1575 = vsub.s32 %v1574, 2
        %vm1576 = vcmp.gt.s32.totalorder 0, %v1575
        %v1577 = vsel %vm1576, 0, %v1575
        %v1578 = vsub.s32 32, %v1577
        %v1579 = vshll.u32 %v1570, %v1577
        %v1580 = vshrl.u32 %v1562, %v1578
        %v1581 = vor.u32 %v1579, %v1580
        %v1582 = vsub.s32 4294967266, %v1577
        %v1583 = vadd.s32 %v1582, 127
        %v1584 = vshll.u32 %v1583, 23
        %v1585 = vor.u32 4788187, %v1584
        %v1586 = vand.u32 2147483647, %v1585
        %v1588 = vcvt.s32.f32 %v1581
        %v1589 = vmul.f32 %v1588, %v1586
        %v1590 = vxor.u32 %v1589, 2147483648
        %v1591 = vsel %vm1508, %v1590, %v1589
        %v1592 = vsub.s32 4, %v1568
        %v1593 = vsel %vm1508, %v1592, %v1568
        %v1594 = vsel %vm1507, %v462, %v1591
        %v1595 = vsel %vm1507, 0, %v1593
        %v1596 = vcosq.f32.pop %v1594
        %v1597 = vsinq.f32.pop %v1594
        %vm1598 = vweird.f32 %v462
        %v1599 = vand.u32 %v1595, 3
        %vm1600 = vcmp.lt.s32.totalorder %v1599, 2
        %vm1601 = vcmp.eq.s32.totalorder %v1599, 0
        %v1602 = vxor.u32 %v1597, 2147483648
        %v1603 = vsel %vm1601, %v1596, %v1602
        %vm1604 = vcmp.eq.s32.totalorder %v1599, 2
        %v1605 = vxor.u32 %v1596, 2147483648
        %v1606 = vsel %vm1604, %v1605, %v1597
        %v1607 = vsel %vm1600, %v1603, %v1606
        %v1608 = vsel %vm1598, nan, %v1607
        %v1609 = vand.u32 2147483647, %v464
        %vm1610 = vcmp.le.f32.partialorder %v1609, 0.7853982
        %vm1611 = vcmp.lt.s32.totalorder %v464, 0
        %v1612 = vand.u32 %v464, 2139095040
        %v1613 = vshrl.u32 %v1612, 23
        %v1614 = vsub.s32 %v1613, 127
        %v1615 = vand.u32 2147483647, %v464
        %v1616 = vand.u32 %v1615, 8388607
        %v1617 = vor.u32 %v1616, 8388608
        %v1618 = vsub.s32 0, %v1617
        %v1619 = vadd.s32 %v1614, 1
        %vm1620 = vcmp.gt.s32.totalorder %v1619, 0
        %v1621 = vsel %vm1620, %v1619, 0
        %v1622 = vshrl.u32 %v1621, 5
        %v1623 = vand.u32 %v1621, 31
        %v1624 = vsub.s32 32, %v1623
        %v1625 = vshrl.u32 683565275, %v1624
        %v1626 = vshll.u32 683565275, %v1623
        %v1627 = vshrl.u32 2475754826, %v1624
        %v1628 = vor.u32 %v1626, %v1627
        %v1629 = vshll.u32 2475754826, %v1623
        %v1630 = vshrl.u32 2131351028, %v1624
        %v1631 = vor.u32 %v1629, %v1630
        %v1632 = vshll.u32 2131351028, %v1623
        %v1633 = vshrl.u32 2102212464, %v1624
        %v1634 = vor.u32 %v1632, %v1633
        %v1635 = vshll.u32 2102212464, %v1623
        %v1636 = vshrl.u32 920167782, %v1624
        %v1637 = vor.u32 %v1635, %v1636
        %v1638 = vshll.u32 920167782, %v1623
        %v1639 = vshrl.u32 1326507024, %v1624
        %v1640 = vor.u32 %v1638, %v1639
        %vm1641 = vcmp.lt.s32.totalorder %v1622, 1
        %vm1642 = vcmp.lt.s32.totalorder %v1622, 2
        %vm1643 = vcmp.lt.s32.totalorder %v1622, 3
        %vm1644 = vcmp.lt.s32.totalorder %v1622, 4
        %v1645 = vsel %vm1641, %v1625, %v1628
        %v1646 = vsel %vm1644, %v1634, 2102212464
        %v1647 = vsel %vm1643, %v1631, %v1646
        %v1648 = vsel %vm1642, %v1645, %v1647
        %v1649 = vsel %vm1641, %v1628, %v1631
        %v1650 = vsel %vm1644, %v1637, 920167782
        %v1651 = vsel %vm1643, %v1634, %v1650
        %v1652 = vsel %vm1642, %v1649, %v1651
        %v1653 = vsel %vm1641, %v1631, %v1634
        %v1654 = vsel %vm1644, %v1640, 1326507024
        %v1655 = vsel %vm1643, %v1637, %v1654
        %v1656 = vsel %vm1642, %v1653, %v1655
        %v1657 = vshll.u32 %v1617, 8
        %v1658 = vmul.u32.u64.compose %v1657, %v1656
        %v1659 = vextract.low.u32 %v1658
        %v1660 = vextract.high.u32 %v1658
        %v1661 = vmul.u32.u64.compose %v1657, %v1652
        %v1662 = vextract.low.u32 %v1661
        %v1663 = vextract.high.u32 %v1661
        %v1664 = vmul.u32 %v1657, %v1648
        %v1665 = vadd.s32 %v1660, %v1662
        %vm1666 = vc.u32 %v1660, %v1662
        %v1667 = vadd.s32 %v1663, 1
        %v1668 = vsel %vm1666, %v1667, %v1663
        %v1669 = vadd.s32 %v1664, %v1668
        %v1670 = vadd.s32 %v1669, 536870912
        %v1671 = vshrl.u32 %v1670, 30
        %v1672 = vshll.u32 %v1671, 30
        %v1673 = vsub.s32 %v1669, %v1672
        %vm1674 = vcmp.lt.s32.totalorder %v1673, 0
        %v1675 = vsub.s32 0, %v1673
        %v1676 = vsel %vm1674, %v1675, %v1673
        %v1677 = vclz %v1676
        %v1678 = vsub.s32 %v1677, 2
        %vm1679 = vcmp.gt.s32.totalorder 0, %v1678
        %v1680 = vsel %vm1679, 0, %v1678
        %v1681 = vsub.s32 32, %v1680
        %v1682 = vshll.u32 %v1673, %v1680
        %v1683 = vshrl.u32 %v1665, %v1681
        %v1684 = vor.u32 %v1682, %v1683
        %v1685 = vsub.s32 4294967266, %v1680
        %v1686 = vadd.s32 %v1685, 127
        %v1687 = vshll.u32 %v1686, 23
        %v1688 = vor.u32 4788187, %v1687
        %v1689 = vand.u32 2147483647, %v1688
        %v1691 = vcvt.s32.f32 %v1684
        %v1692 = vmul.f32 %v1691, %v1689
        %v1693 = vxor.u32 %v1692, 2147483648
        %v1694 = vsel %vm1611, %v1693, %v1692
        %v1695 = vsub.s32 4, %v1671
        %v1696 = vsel %vm1611, %v1695, %v1671
        %v1697 = vsel %vm1610, %v464, %v1694
        %v1698 = vsel %vm1610, 0, %v1696
        %v1699 = vcosq.f32.pop %v1697
        %v1700 = vsinq.f32.pop %v1697
        %vm1701 = vweird.f32 %v464
        %v1702 = vand.u32 %v1698, 3
        %vm1703 = vcmp.lt.s32.totalorder %v1702, 2
        %vm1704 = vcmp.eq.s32.totalorder %v1702, 0
        %v1705 = vxor.u32 %v1700, 2147483648
        %v1706 = vsel %vm1704, %v1699, %v1705
        %vm1707 = vcmp.eq.s32.totalorder %v1702, 2
        %v1708 = vxor.u32 %v1699, 2147483648
        %v1709 = vsel %vm1707, %v1708, %v1700
        %v1710 = vsel %vm1703, %v1706, %v1709
        %v1711 = vsel %vm1701, nan, %v1710
        %v1712 = vpack.c.bf16 %v1402, %v1196
        %v1713 = vpack.c.bf16 %v1505, %v1299
        %v1714 = vpack.c.bf16 %v1608, %v1608
        %v1715 = vpack.c.bf16 %v1711, %v1711
        %v1717 = vpack.c.bf16 %v362, %v362
        %v1718 = vpack.c.bf16 %v367, %v367
        %v1719 = vld [vmem:[%s2] sm:$0xf]
        %v1720 = vld [vmem:[%s2 + $0x4] sm:$0xf]
        %v1721 = vld [vmem:[%s2 + $0x8] sm:$0xf]
        %v1722 = vld [vmem:[%s2 + $0xc] sm:$0xf]
        %v1723 = vld [vmem:[%s2 + $0x10] sm:$0xf]
        %v1724 = vld [vmem:[%s2 + $0x14] sm:$0xf]
        %v1725 = vld [vmem:[%s2 + $0x18] sm:$0xf]
        %v1726 = vld [vmem:[%s2 + $0x1c] sm:$0xf]
        %v1727 = vld [vmem:[%s2 + $0x20] sm:$0xf]
        %v1728 = vld [vmem:[%s2 + $0x24] sm:$0xf]
        %v1729 = vld [vmem:[%s2 + $0x28] sm:$0xf]
        %v1730 = vld [vmem:[%s2 + $0x2c] sm:$0xf]
        %v1731 = vld [vmem:[%s2 + $0x30] sm:$0xf]
        %v1732 = vld [vmem:[%s2 + $0x34] sm:$0xf]
        %v1733 = vld [vmem:[%s2 + $0x38] sm:$0xf]
        %v1734 = vld [vmem:[%s2 + $0x3c] sm:$0xf]
        %v1735 = vld [vmem:[%s3] sm:$0xf]
        %v1736 = vld [vmem:[%s3 + $0x4] sm:$0xf]
        %v1737 = vld [vmem:[%s3 + $0x8] sm:$0xf]
        %v1738 = vld [vmem:[%s3 + $0xc] sm:$0xf]
        %v1739 = vld [vmem:[%s3 + $0x10] sm:$0xf]
        %v1740 = vld [vmem:[%s3 + $0x14] sm:$0xf]
        %v1741 = vld [vmem:[%s3 + $0x18] sm:$0xf]
        %v1742 = vld [vmem:[%s3 + $0x1c] sm:$0xf]
        %v1743 = vld [vmem:[%s3 + $0x20] sm:$0xf]
        %v1744 = vld [vmem:[%s3 + $0x24] sm:$0xf]
        %v1745 = vld [vmem:[%s3 + $0x28] sm:$0xf]
        %v1746 = vld [vmem:[%s3 + $0x2c] sm:$0xf]
        %v1747 = vld [vmem:[%s3 + $0x30] sm:$0xf]
        %v1748 = vld [vmem:[%s3 + $0x34] sm:$0xf]
        %v1749 = vld [vmem:[%s3 + $0x38] sm:$0xf]
        %v1750 = vld [vmem:[%s3 + $0x3c] sm:$0xf]
        %v1767 = vunpack.c.l.b16 %v1735
        %v1768 = vunpack.c.l.b16 %v1736
        %v1769 = vunpack.c.l.b16 %v1737
        %v1770 = vunpack.c.l.b16 %v1738
        %v1771 = vunpack.c.l.b16 %v1739
        %v1772 = vunpack.c.l.b16 %v1740
        %v1773 = vunpack.c.l.b16 %v1741
        %v1774 = vunpack.c.l.b16 %v1742
        %v1775 = vunpack.c.l.b16 %v1743
        %v1776 = vunpack.c.l.b16 %v1744
        %v1777 = vunpack.c.l.b16 %v1745
        %v1778 = vunpack.c.l.b16 %v1746
        %v1779 = vunpack.c.l.b16 %v1747
        %v1780 = vunpack.c.l.b16 %v1748
        %v1781 = vunpack.c.l.b16 %v1749
        %v1782 = vunpack.c.l.b16 %v1750
        %v1783 = vpack.c.b16 %v1768, %v1767
        %v1784 = vpack.c.b16 %v1770, %v1769
        %v1785 = vpack.c.b16 %v1772, %v1771
        %v1786 = vpack.c.b16 %v1774, %v1773
        %v1787 = vpack.c.b16 %v1776, %v1775
        %v1788 = vpack.c.b16 %v1778, %v1777
        %v1789 = vpack.c.b16 %v1780, %v1779
        %v1790 = vpack.c.b16 %v1782, %v1781
        %vm1791 = vcmask 195584
        %v1793 = vsel %vm1791, %v1783, 0
        %v1796 = vsel %vm1791, %v1784, 0
        %v1799 = vsel %vm1791, %v1785, 0
        %v1802 = vsel %vm1791, %v1786, 0
        %v1805 = vsel %vm1791, %v1787, 0
        %v1808 = vsel %vm1791, %v1788, 0
        %v1811 = vsel %vm1791, %v1789, 0
        %v1814 = vsel %vm1791, %v1790, 0
        %v1817 = vsel %vm378, %v1092, 0
        %v1820 = vsel %vm378, %v1093, 0
        %1822 = vmatprep.subr.bf16.mxu0 %v1091
        %1823 = vmatpush1.bf16.msra.mxu0 %v1090
        %1824 = vmatprep.subr.bf16.mxu0 %v1820
        %1825 = vmatpush1.bf16.msra.mxu0 %v1817
        %1826 = vmatprep.subr.bf16.mxu0 0
        %1827 = vmatpush1.bf16.msra.mxu0 0
        %1828 = vmatprep.subr.bf16.mxu0 0
        %1829 = vmatpush1.bf16.msra.mxu0 0
        %1830 = vmatprep.subr.bf16.mxu0 0
        %1831 = vmatpush1.bf16.msra.mxu0 0
        %1832 = vmatprep.subr.bf16.mxu0 0
        %1833 = vmatpush1.bf16.msra.mxu0 0
        %1834 = vmatprep.subr.bf16.mxu0 0
        %1835 = vmatpush1.bf16.msra.mxu0 0
        %1836 = vmatprep.subr.bf16.mxu0 0
        %1837 = vmatpush1.bf16.msra.mxu0 0
        %1838 = vmatprep.subr.bf16.mxu0 0
        %1839 = vmatpush1.bf16.msra.mxu0 0
        %1840 = vmatprep.subr.bf16.mxu0 0
        %1841 = vmatpush1.bf16.msra.mxu0 0
        %1842 = vmatprep.subr.bf16.mxu0 0
        %1843 = vmatpush1.bf16.msra.mxu0 0
        %1844 = vmatprep.subr.bf16.mxu0 0
        %1845 = vmatpush1.bf16.msra.mxu0 0
        %1846 = vmatprep.subr.bf16.mxu0 0
        %1847 = vmatpush1.bf16.msra.mxu0 0
        %1848 = vmatprep.subr.bf16.mxu0 0
        %1849 = vmatpush1.bf16.msra.mxu0 0
        %1850 = vmatprep.subr.bf16.mxu0 0
        %1851 = vmatpush1.bf16.msra.mxu0 0
        %1852 = vmatprep.subr.bf16.mxu0 0
        %1853 = vmatpush1.bf16.msra.mxu0 0
        %1854 = vmatprep.mubr.bf16.mxu0 0
        %1855 = vmatmul.mubr.bf16.gmra.mrb[0].mxu0 %v1793
        %v1856 = vpop.f32.mrb[0].mxu0
        %v1857 = vadd.f32 0.0, %v1856
        %v1858 = vpop.f32.mrb[0].mxu0
        %v1859 = vadd.f32 0.0, %v1858
        %v1860 = vpop.f32.mrb[0].mxu0
        %v1861 = vadd.f32 0.0, %v1860
        %v1862 = vpop.f32.mrb[0].mxu0
        %v1863 = vadd.f32 0.0, %v1862
        %1864 = vmatprep.mubr.bf16.mxu0 0
        %1865 = vmatmul.mubr.bf16.gmra.mrb[0].mxu0 %v1796
        %v1866 = vpop.f32.mrb[0].mxu0
        %v1867 = vadd.f32 0.0, %v1866
        %v1868 = vpop.f32.mrb[0].mxu0
        %v1869 = vadd.f32 0.0, %v1868
        %v1870 = vpop.f32.mrb[0].mxu0
        %v1871 = vadd.f32 0.0, %v1870
        %v1872 = vpop.f32.mrb[0].mxu0
        %v1873 = vadd.f32 0.0, %v1872
        %1874 = vmatprep.mubr.bf16.mxu0 0
        %1875 = vmatmul.mubr.bf16.gmra.mrb[0].mxu0 %v1799
        %v1876 = vpop.f32.mrb[0].mxu0
        %v1877 = vadd.f32 0.0, %v1876
        %v1878 = vpop.f32.mrb[0].mxu0
        %v1879 = vadd.f32 0.0, %v1878
        %v1880 = vpop.f32.mrb[0].mxu0
        %v1881 = vadd.f32 0.0, %v1880
        %v1882 = vpop.f32.mrb[0].mxu0
        %v1883 = vadd.f32 0.0, %v1882
        %1884 = vmatprep.mubr.bf16.mxu0 0
        %1885 = vmatmul.mubr.bf16.gmra.mrb[0].mxu0 %v1802
        %v1886 = vpop.f32.mrb[0].mxu0
        %v1887 = vadd.f32 0.0, %v1886
        %v1888 = vpop.f32.mrb[0].mxu0
        %v1889 = vadd.f32 0.0, %v1888
        %v1890 = vpop.f32.mrb[0].mxu0
        %v1891 = vadd.f32 0.0, %v1890
        %v1892 = vpop.f32.mrb[0].mxu0
        %v1893 = vadd.f32 0.0, %v1892
        %1894 = vmatprep.mubr.bf16.mxu0 0
        %1895 = vmatmul.mubr.bf16.gmra.mrb[0].mxu0 %v1805
        %v1896 = vpop.f32.mrb[0].mxu0
        %v1897 = vadd.f32 0.0, %v1896
        %v1898 = vpop.f32.mrb[0].mxu0
        %v1899 = vadd.f32 0.0, %v1898
        %v1900 = vpop.f32.mrb[0].mxu0
        %v1901 = vadd.f32 0.0, %v1900
        %v1902 = vpop.f32.mrb[0].mxu0
        %v1903 = vadd.f32 0.0, %v1902
        %1904 = vmatprep.mubr.bf16.mxu0 0
        %1905 = vmatmul.mubr.bf16.gmra.mrb[0].mxu0 %v1808
        %v1906 = vpop.f32.mrb[0].mxu0
        %v1907 = vadd.f32 0.0, %v1906
        %v1908 = vpop.f32.mrb[0].mxu0
        %v1909 = vadd.f32 0.0, %v1908
        %v1910 = vpop.f32.mrb[0].mxu0
        %v1911 = vadd.f32 0.0, %v1910
        %v1912 = vpop.f32.mrb[0].mxu0
        %v1913 = vadd.f32 0.0, %v1912
        %1914 = vmatprep.mubr.bf16.mxu0 0
        %1915 = vmatmul.mubr.bf16.gmra.mrb[0].mxu0 %v1811
        %v1916 = vpop.f32.mrb[0].mxu0
        %v1917 = vadd.f32 0.0, %v1916
        %v1918 = vpop.f32.mrb[0].mxu0
        %v1919 = vadd.f32 0.0, %v1918
        %v1920 = vpop.f32.mrb[0].mxu0
        %v1921 = vadd.f32 0.0, %v1920
        %v1922 = vpop.f32.mrb[0].mxu0
        %v1923 = vadd.f32 0.0, %v1922
        %1924 = vmatprep.mubr.bf16.mxu0 0
        %1925 = vmatmul.mubr.bf16.gmra.mrb[0].mxu0 %v1814
        %v1926 = vpop.f32.mrb[0].mxu0
        %v1927 = vadd.f32 0.0, %v1926
        %v1928 = vpop.f32.mrb[0].mxu0
        %v1929 = vadd.f32 0.0, %v1928
        %v1930 = vpop.f32.mrb[0].mxu0
        %v1931 = vadd.f32 0.0, %v1930
        %v1932 = vpop.f32.mrb[0].mxu0
        %v1933 = vadd.f32 0.0, %v1932
        %1934 = vdwg.mxu0
        %v1951 = vunpack.c.l.b16 %v1719
        %v1952 = vunpack.c.l.b16 %v1720
        %v1953 = vunpack.c.l.b16 %v1721
        %v1954 = vunpack.c.l.b16 %v1722
        %v1955 = vunpack.c.l.b16 %v1723
        %v1956 = vunpack.c.l.b16 %v1724
        %v1957 = vunpack.c.l.b16 %v1725
        %v1958 = vunpack.c.l.b16 %v1726
        %v1959 = vunpack.c.l.b16 %v1727
        %v1960 = vunpack.c.l.b16 %v1728
        %v1961 = vunpack.c.l.b16 %v1729
        %v1962 = vunpack.c.l.b16 %v1730
        %v1963 = vunpack.c.l.b16 %v1731
        %v1964 = vunpack.c.l.b16 %v1732
        %v1965 = vunpack.c.l.b16 %v1733
        %v1966 = vunpack.c.l.b16 %v1734
        %v1967 = vpack.c.b16 %v1952, %v1951
        %v1968 = vpack.c.b16 %v1954, %v1953
        %v1969 = vpack.c.b16 %v1956, %v1955
        %v1970 = vpack.c.b16 %v1958, %v1957
        %v1971 = vpack.c.b16 %v1960, %v1959
        %v1972 = vpack.c.b16 %v1962, %v1961
        %v1973 = vpack.c.b16 %v1964, %v1963
        %v1974 = vpack.c.b16 %v1966, %v1965
        %v1976 = vsel %vm368, %v1967, 0
        %v1979 = vsel %vm368, %v1968, 0
        %v1982 = vsel %vm368, %v1969, 0
        %v1985 = vsel %vm368, %v1970, 0
        %v1988 = vsel %vm368, %v1971, 0
        %v1991 = vsel %vm368, %v1972, 0
        %v1994 = vsel %vm368, %v1973, 0
        %v1997 = vsel %vm368, %v1974, 0
        %vm1999 = vcmask 1041408
        %v2001 = vsel %vm1999, %v1717, 0
        %v2004 = vsel %vm1999, %v1718, 0
        %2006 = vmatprep.subr.bf16.mxu0 %v2004
        %2007 = vmatpush1.bf16.msra.mxu0 %v2001
        %2008 = vmatprep.subr.bf16.mxu0 0
        %2009 = vmatpush1.bf16.msra.mxu0 0
        %2010 = vmatprep.subr.bf16.mxu0 0
        %2011 = vmatpush1.bf16.msra.mxu0 0
        %2012 = vmatprep.subr.bf16.mxu0 0
        %2013 = vmatpush1.bf16.msra.mxu0 0
        %2014 = vmatprep.subr.bf16.mxu0 0
        %2015 = vmatpush1.bf16.msra.mxu0 0
        %2016 = vmatprep.subr.bf16.mxu0 0
        %2017 = vmatpush1.bf16.msra.mxu0 0
        %2018 = vmatprep.subr.bf16.mxu0 0
        %2019 = vmatpush1.bf16.msra.mxu0 0
        %2020 = vmatprep.subr.bf16.mxu0 0
        %2021 = vmatpush1.bf16.msra.mxu0 0
        %2022 = vmatprep.subr.bf16.mxu0 0
        %2023 = vmatpush1.bf16.msra.mxu0 0
        %2024 = vmatprep.subr.bf16.mxu0 0
        %2025 = vmatpush1.bf16.msra.mxu0 0
        %2026 = vmatprep.subr.bf16.mxu0 0
        %2027 = vmatpush1.bf16.msra.mxu0 0
        %2028 = vmatprep.subr.bf16.mxu0 0
        %2029 = vmatpush1.bf16.msra.mxu0 0
        %2030 = vmatprep.subr.bf16.mxu0 0
        %2031 = vmatpush1.bf16.msra.mxu0 0
        %2032 = vmatprep.subr.bf16.mxu0 0
        %2033 = vmatpush1.bf16.msra.mxu0 0
        %2034 = vmatprep.subr.bf16.mxu0 0
        %2035 = vmatpush1.bf16.msra.mxu0 0
        %2036 = vmatprep.subr.bf16.mxu0 0
        %2037 = vmatpush1.bf16.msra.mxu0 0
        %2038 = vmatprep.mubr.bf16.mxu0 0
        %2039 = vmatmul.mubr.bf16.gmra.mrb[0].mxu0 %v1976
        %v2040 = vpop.f32.mrb[0].mxu0
        %v2041 = vadd.f32 %v1857, %v2040
        %v2042 = vpop.f32.mrb[0].mxu0
        %v2043 = vadd.f32 %v1859, %v2042
        %v2044 = vpop.f32.mrb[0].mxu0
        %v2045 = vadd.f32 %v1861, %v2044
        %v2046 = vpop.f32.mrb[0].mxu0
        %v2047 = vadd.f32 %v1863, %v2046
        %2048 = vmatprep.mubr.bf16.mxu0 0
        %2049 = vmatmul.mubr.bf16.gmra.mrb[0].mxu0 %v1979
        %v2050 = vpop.f32.mrb[0].mxu0
        %v2051 = vadd.f32 %v1867, %v2050
        %v2052 = vpop.f32.mrb[0].mxu0
        %v2053 = vadd.f32 %v1869, %v2052
        %v2054 = vpop.f32.mrb[0].mxu0
        %v2055 = vadd.f32 %v1871, %v2054
        %v2056 = vpop.f32.mrb[0].mxu0
        %v2057 = vadd.f32 %v1873, %v2056
        %2058 = vmatprep.mubr.bf16.mxu0 0
        %2059 = vmatmul.mubr.bf16.gmra.mrb[0].mxu0 %v1982
        %v2060 = vpop.f32.mrb[0].mxu0
        %v2061 = vadd.f32 %v1877, %v2060
        %v2062 = vpop.f32.mrb[0].mxu0
        %v2063 = vadd.f32 %v1879, %v2062
        %v2064 = vpop.f32.mrb[0].mxu0
        %v2065 = vadd.f32 %v1881, %v2064
        %v2066 = vpop.f32.mrb[0].mxu0
        %v2067 = vadd.f32 %v1883, %v2066
        %2068 = vmatprep.mubr.bf16.mxu0 0
        %2069 = vmatmul.mubr.bf16.gmra.mrb[0].mxu0 %v1985
        %v2070 = vpop.f32.mrb[0].mxu0
        %v2071 = vadd.f32 %v1887, %v2070
        %v2072 = vpop.f32.mrb[0].mxu0
        %v2073 = vadd.f32 %v1889, %v2072
        %v2074 = vpop.f32.mrb[0].mxu0
        %v2075 = vadd.f32 %v1891, %v2074
        %v2076 = vpop.f32.mrb[0].mxu0
        %v2077 = vadd.f32 %v1893, %v2076
        %2078 = vmatprep.mubr.bf16.mxu0 0
        %2079 = vmatmul.mubr.bf16.gmra.mrb[0].mxu0 %v1988
        %v2080 = vpop.f32.mrb[0].mxu0
        %v2081 = vadd.f32 %v1897, %v2080
        %v2082 = vpop.f32.mrb[0].mxu0
        %v2083 = vadd.f32 %v1899, %v2082
        %v2084 = vpop.f32.mrb[0].mxu0
        %v2085 = vadd.f32 %v1901, %v2084
        %v2086 = vpop.f32.mrb[0].mxu0
        %v2087 = vadd.f32 %v1903, %v2086
        %2088 = vmatprep.mubr.bf16.mxu0 0
        %2089 = vmatmul.mubr.bf16.gmra.mrb[0].mxu0 %v1991
        %v2090 = vpop.f32.mrb[0].mxu0
        %v2091 = vadd.f32 %v1907, %v2090
        %v2092 = vpop.f32.mrb[0].mxu0
        %v2093 = vadd.f32 %v1909, %v2092
        %v2094 = vpop.f32.mrb[0].mxu0
        %v2095 = vadd.f32 %v1911, %v2094
        %v2096 = vpop.f32.mrb[0].mxu0
        %v2097 = vadd.f32 %v1913, %v2096
        %2098 = vmatprep.mubr.bf16.mxu0 0
        %2099 = vmatmul.mubr.bf16.gmra.mrb[0].mxu0 %v1994
        %v2100 = vpop.f32.mrb[0].mxu0
        %v2101 = vadd.f32 %v1917, %v2100
        %v2102 = vpop.f32.mrb[0].mxu0
        %v2103 = vadd.f32 %v1919, %v2102
        %v2104 = vpop.f32.mrb[0].mxu0
        %v2105 = vadd.f32 %v1921, %v2104
        %v2106 = vpop.f32.mrb[0].mxu0
        %v2107 = vadd.f32 %v1923, %v2106
        %2108 = vmatprep.mubr.bf16.mxu0 0
        %2109 = vmatmul.mubr.bf16.gmra.mrb[0].mxu0 %v1997
        %v2110 = vpop.f32.mrb[0].mxu0
        %v2111 = vadd.f32 %v1927, %v2110
        %v2112 = vpop.f32.mrb[0].mxu0
        %v2113 = vadd.f32 %v1929, %v2112
        %v2114 = vpop.f32.mrb[0].mxu0
        %v2115 = vadd.f32 %v1931, %v2114
        %v2116 = vpop.f32.mrb[0].mxu0
        %v2117 = vadd.f32 %v1933, %v2116
        %2118 = vdwg.mxu0
        %v2119 = vld [vmem:[%s4] sm:$0xf]
        %v2120 = vld [vmem:[%s4 + $0x4] sm:$0xf]
        %v2121 = vld [vmem:[%s4 + $0x8] sm:$0xf]
        %v2122 = vld [vmem:[%s4 + $0xc] sm:$0xf]
        %v2123 = vld [vmem:[%s4 + $0x10] sm:$0xf]
        %v2124 = vld [vmem:[%s4 + $0x14] sm:$0xf]
        %v2125 = vld [vmem:[%s4 + $0x18] sm:$0xf]
        %v2126 = vld [vmem:[%s4 + $0x1c] sm:$0xf]
        %v2127 = vld [vmem:[%s4 + $0x20] sm:$0xf]
        %v2128 = vld [vmem:[%s4 + $0x24] sm:$0xf]
        %v2129 = vld [vmem:[%s4 + $0x28] sm:$0xf]
        %v2130 = vld [vmem:[%s4 + $0x2c] sm:$0xf]
        %v2131 = vld [vmem:[%s4 + $0x30] sm:$0xf]
        %v2132 = vld [vmem:[%s4 + $0x34] sm:$0xf]
        %v2133 = vld [vmem:[%s4 + $0x38] sm:$0xf]
        %v2134 = vld [vmem:[%s4 + $0x3c] sm:$0xf]
        %v2151 = vunpack.c.l.b16 %v2119
        %v2152 = vunpack.c.l.b16 %v2120
        %v2153 = vunpack.c.l.b16 %v2121
        %v2154 = vunpack.c.l.b16 %v2122
        %v2155 = vunpack.c.l.b16 %v2123
        %v2156 = vunpack.c.l.b16 %v2124
        %v2157 = vunpack.c.l.b16 %v2125
        %v2158 = vunpack.c.l.b16 %v2126
        %v2159 = vunpack.c.l.b16 %v2127
        %v2160 = vunpack.c.l.b16 %v2128
        %v2161 = vunpack.c.l.b16 %v2129
        %v2162 = vunpack.c.l.b16 %v2130
        %v2163 = vunpack.c.l.b16 %v2131
        %v2164 = vunpack.c.l.b16 %v2132
        %v2165 = vunpack.c.l.b16 %v2133
        %v2166 = vunpack.c.l.b16 %v2134
        %v2167 = vpack.c.b16 %v2152, %v2151
        %v2168 = vpack.c.b16 %v2154, %v2153
        %v2169 = vpack.c.b16 %v2156, %v2155
        %v2170 = vpack.c.b16 %v2158, %v2157
        %v2171 = vpack.c.b16 %v2160, %v2159
        %v2172 = vpack.c.b16 %v2162, %v2161
        %v2173 = vpack.c.b16 %v2164, %v2163
        %v2174 = vpack.c.b16 %v2166, %v2165
        %v2176 = vsel %vm1791, %v2167, 0
        %v2179 = vsel %vm1791, %v2168, 0
        %v2182 = vsel %vm1791, %v2169, 0
        %v2185 = vsel %vm1791, %v2170, 0
        %v2188 = vsel %vm1791, %v2171, 0
        %v2191 = vsel %vm1791, %v2172, 0
        %v2194 = vsel %vm1791, %v2173, 0
        %v2197 = vsel %vm1791, %v2174, 0
        %v2200 = vsel %vm378, %v1714, 0
        %v2203 = vsel %vm378, %v1715, 0
        %2205 = vmatprep.subr.bf16.mxu0 %v1713
        %2206 = vmatpush1.bf16.msra.mxu0 %v1712
        %2207 = vmatprep.subr.bf16.mxu0 %v2203
        %2208 = vmatpush1.bf16.msra.mxu0 %v2200
        %2209 = vmatprep.subr.bf16.mxu0 0
        %2210 = vmatpush1.bf16.msra.mxu0 0
        %2211 = vmatprep.subr.bf16.mxu0 0
        %2212 = vmatpush1.bf16.msra.mxu0 0
        %2213 = vmatprep.subr.bf16.mxu0 0
        %2214 = vmatpush1.bf16.msra.mxu0 0
        %2215 = vmatprep.subr.bf16.mxu0 0
        %2216 = vmatpush1.bf16.msra.mxu0 0
        %2217 = vmatprep.subr.bf16.mxu0 0
        %2218 = vmatpush1.bf16.msra.mxu0 0
        %2219 = vmatprep.subr.bf16.mxu0 0
        %2220 = vmatpush1.bf16.msra.mxu0 0
        %2221 = vmatprep.subr.bf16.mxu0 0
        %2222 = vmatpush1.bf16.msra.mxu0 0
        %2223 = vmatprep.subr.bf16.mxu0 0
        %2224 = vmatpush1.bf16.msra.mxu0 0
        %2225 = vmatprep.subr.bf16.mxu0 0
        %2226 = vmatpush1.bf16.msra.mxu0 0
        %2227 = vmatprep.subr.bf16.mxu0 0
        %2228 = vmatpush1.bf16.msra.mxu0 0
        %2229 = vmatprep.subr.bf16.mxu0 0
        %2230 = vmatpush1.bf16.msra.mxu0 0
        %2231 = vmatprep.subr.bf16.mxu0 0
        %2232 = vmatpush1.bf16.msra.mxu0 0
        %2233 = vmatprep.subr.bf16.mxu0 0
        %2234 = vmatpush1.bf16.msra.mxu0 0
        %2235 = vmatprep.subr.bf16.mxu0 0
        %2236 = vmatpush1.bf16.msra.mxu0 0
        %2237 = vmatprep.mubr.bf16.mxu0 0
        %2238 = vmatmul.mubr.bf16.gmra.mrb[0].mxu0 %v2176
        %v2239 = vpop.f32.mrb[0].mxu0
        %v2240 = vadd.f32 0.0, %v2239
        %v2241 = vpop.f32.mrb[0].mxu0
        %v2242 = vadd.f32 0.0, %v2241
        %v2243 = vpop.f32.mrb[0].mxu0
        %v2244 = vadd.f32 0.0, %v2243
        %v2245 = vpop.f32.mrb[0].mxu0
        %v2246 = vadd.f32 0.0, %v2245
        %2247 = vmatprep.mubr.bf16.mxu0 0
        %2248 = vmatmul.mubr.bf16.gmra.mrb[0].mxu0 %v2179
        %v2249 = vpop.f32.mrb[0].mxu0
        %v2250 = vadd.f32 0.0, %v2249
        %v2251 = vpop.f32.mrb[0].mxu0
        %v2252 = vadd.f32 0.0, %v2251
        %v2253 = vpop.f32.mrb[0].mxu0
        %v2254 = vadd.f32 0.0, %v2253
        %v2255 = vpop.f32.mrb[0].mxu0
        %v2256 = vadd.f32 0.0, %v2255
        %2257 = vmatprep.mubr.bf16.mxu0 0
        %2258 = vmatmul.mubr.bf16.gmra.mrb[0].mxu0 %v2182
        %v2259 = vpop.f32.mrb[0].mxu0
        %v2260 = vadd.f32 0.0, %v2259
        %v2261 = vpop.f32.mrb[0].mxu0
        %v2262 = vadd.f32 0.0, %v2261
        %v2263 = vpop.f32.mrb[0].mxu0
        %v2264 = vadd.f32 0.0, %v2263
        %v2265 = vpop.f32.mrb[0].mxu0
        %v2266 = vadd.f32 0.0, %v2265
        %2267 = vmatprep.mubr.bf16.mxu0 0
        %2268 = vmatmul.mubr.bf16.gmra.mrb[0].mxu0 %v2185
        %v2269 = vpop.f32.mrb[0].mxu0
        %v2270 = vadd.f32 0.0, %v2269
        %v2271 = vpop.f32.mrb[0].mxu0
        %v2272 = vadd.f32 0.0, %v2271
        %v2273 = vpop.f32.mrb[0].mxu0
        %v2274 = vadd.f32 0.0, %v2273
        %v2275 = vpop.f32.mrb[0].mxu0
        %v2276 = vadd.f32 0.0, %v2275
        %2277 = vmatprep.mubr.bf16.mxu0 0
        %2278 = vmatmul.mubr.bf16.gmra.mrb[0].mxu0 %v2188
        %v2279 = vpop.f32.mrb[0].mxu0
        %v2280 = vadd.f32 0.0, %v2279
        %v2281 = vpop.f32.mrb[0].mxu0
        %v2282 = vadd.f32 0.0, %v2281
        %v2283 = vpop.f32.mrb[0].mxu0
        %v2284 = vadd.f32 0.0, %v2283
        %v2285 = vpop.f32.mrb[0].mxu0
        %v2286 = vadd.f32 0.0, %v2285
        %2287 = vmatprep.mubr.bf16.mxu0 0
        %2288 = vmatmul.mubr.bf16.gmra.mrb[0].mxu0 %v2191
        %v2289 = vpop.f32.mrb[0].mxu0
        %v2290 = vadd.f32 0.0, %v2289
        %v2291 = vpop.f32.mrb[0].mxu0
        %v2292 = vadd.f32 0.0, %v2291
        %v2293 = vpop.f32.mrb[0].mxu0
        %v2294 = vadd.f32 0.0, %v2293
        %v2295 = vpop.f32.mrb[0].mxu0
        %v2296 = vadd.f32 0.0, %v2295
        %2297 = vmatprep.mubr.bf16.mxu0 0
        %2298 = vmatmul.mubr.bf16.gmra.mrb[0].mxu0 %v2194
        %v2299 = vpop.f32.mrb[0].mxu0
        %v2300 = vadd.f32 0.0, %v2299
        %v2301 = vpop.f32.mrb[0].mxu0
        %v2302 = vadd.f32 0.0, %v2301
        %v2303 = vpop.f32.mrb[0].mxu0
        %v2304 = vadd.f32 0.0, %v2303
        %v2305 = vpop.f32.mrb[0].mxu0
        %v2306 = vadd.f32 0.0, %v2305
        %2307 = vmatprep.mubr.bf16.mxu0 0
        %2308 = vmatmul.mubr.bf16.gmra.mrb[0].mxu0 %v2197
        %v2309 = vpop.f32.mrb[0].mxu0
        %v2310 = vadd.f32 0.0, %v2309
        %v2311 = vpop.f32.mrb[0].mxu0
        %v2312 = vadd.f32 0.0, %v2311
        %v2313 = vpop.f32.mrb[0].mxu0
        %v2314 = vadd.f32 0.0, %v2313
        %v2315 = vpop.f32.mrb[0].mxu0
        %v2316 = vadd.f32 0.0, %v2315
        %2317 = vdwg.mxu0
        %v2318 = vadd.f32 %v2041, %v2240
        %v2319 = vadd.f32 %v2043, %v2242
        %v2320 = vadd.f32 %v2045, %v2244
        %v2321 = vadd.f32 %v2047, %v2246
        %v2322 = vadd.f32 %v2051, %v2250
        %v2323 = vadd.f32 %v2053, %v2252
        %v2324 = vadd.f32 %v2055, %v2254
        %v2325 = vadd.f32 %v2057, %v2256
        %v2326 = vadd.f32 %v2061, %v2260
        %v2327 = vadd.f32 %v2063, %v2262
        %v2328 = vadd.f32 %v2065, %v2264
        %v2329 = vadd.f32 %v2067, %v2266
        %v2330 = vadd.f32 %v2071, %v2270
        %v2331 = vadd.f32 %v2073, %v2272
        %v2332 = vadd.f32 %v2075, %v2274
        %v2333 = vadd.f32 %v2077, %v2276
        %v2334 = vadd.f32 %v2081, %v2280
        %v2335 = vadd.f32 %v2083, %v2282
        %v2336 = vadd.f32 %v2085, %v2284
        %v2337 = vadd.f32 %v2087, %v2286
        %v2338 = vadd.f32 %v2091, %v2290
        %v2339 = vadd.f32 %v2093, %v2292
        %v2340 = vadd.f32 %v2095, %v2294
        %v2341 = vadd.f32 %v2097, %v2296
        %v2342 = vadd.f32 %v2101, %v2300
        %v2343 = vadd.f32 %v2103, %v2302
        %v2344 = vadd.f32 %v2105, %v2304
        %v2345 = vadd.f32 %v2107, %v2306
        %v2346 = vadd.f32 %v2111, %v2310
        %v2347 = vadd.f32 %v2113, %v2312
        %v2348 = vadd.f32 %v2115, %v2314
        %v2349 = vadd.f32 %v2117, %v2316
        %v2350 = vld [vmem:[%s5] sm:$0xff]
        %v2351 = vld [vmem:[%s5 + $0x8] sm:$0xff]
        %v2352 = vld [vmem:[%s5 + $0x10] sm:$0xff]
        %v2353 = vld [vmem:[%s5 + $0x18] sm:$0xff]
        %v2354 = vld [vmem:[%s5 + $0x20] sm:$0xff]
        %v2355 = vld [vmem:[%s5 + $0x28] sm:$0xff]
        %v2356 = vld [vmem:[%s5 + $0x30] sm:$0xff]
        %v2357 = vld [vmem:[%s5 + $0x38] sm:$0xff]
        %v2358 = vld [vmem:[%s5 + $0x40] sm:$0xff]
        %v2359 = vld [vmem:[%s5 + $0x48] sm:$0xff]
        %v2360 = vld [vmem:[%s5 + $0x50] sm:$0xff]
        %v2361 = vld [vmem:[%s5 + $0x58] sm:$0xff]
        %v2362 = vld [vmem:[%s5 + $0x60] sm:$0xff]
        %v2363 = vld [vmem:[%s5 + $0x68] sm:$0xff]
        %v2364 = vld [vmem:[%s5 + $0x70] sm:$0xff]
        %v2365 = vld [vmem:[%s5 + $0x78] sm:$0xff]
        %2367 = vset.pattern.permute.xlu0 0
        %2368 = vperm.xlu0 %2367, %v2350
        %v2369 = vpop.permute.xlu0 %2368
        %2372 = vset.pattern.permute.xlu0 0
        %2373 = vperm.xlu0 %2372, %v2351
        %v2374 = vpop.permute.xlu0 %2373
        %2377 = vset.pattern.permute.xlu0 0
        %2378 = vperm.xlu0 %2377, %v2352
        %v2379 = vpop.permute.xlu0 %2378
        %2382 = vset.pattern.permute.xlu0 0
        %2383 = vperm.xlu0 %2382, %v2353
        %v2384 = vpop.permute.xlu0 %2383
        %2387 = vset.pattern.permute.xlu0 0
        %2388 = vperm.xlu0 %2387, %v2354
        %v2389 = vpop.permute.xlu0 %2388
        %2392 = vset.pattern.permute.xlu0 0
        %2393 = vperm.xlu0 %2392, %v2355
        %v2394 = vpop.permute.xlu0 %2393
        %2397 = vset.pattern.permute.xlu0 0
        %2398 = vperm.xlu0 %2397, %v2356
        %v2399 = vpop.permute.xlu0 %2398
        %2402 = vset.pattern.permute.xlu0 0
        %2403 = vperm.xlu0 %2402, %v2357
        %v2404 = vpop.permute.xlu0 %2403
        %2407 = vset.pattern.permute.xlu0 0
        %2408 = vperm.xlu0 %2407, %v2358
        %v2409 = vpop.permute.xlu0 %2408
        %2412 = vset.pattern.permute.xlu0 0
        %2413 = vperm.xlu0 %2412, %v2359
        %v2414 = vpop.permute.xlu0 %2413
        %2417 = vset.pattern.permute.xlu0 0
        %2418 = vperm.xlu0 %2417, %v2360
        %v2419 = vpop.permute.xlu0 %2418
        %2422 = vset.pattern.permute.xlu0 0
        %2423 = vperm.xlu0 %2422, %v2361
        %v2424 = vpop.permute.xlu0 %2423
        %2427 = vset.pattern.permute.xlu0 0
        %2428 = vperm.xlu0 %2427, %v2362
        %v2429 = vpop.permute.xlu0 %2428
        %2432 = vset.pattern.permute.xlu0 0
        %2433 = vperm.xlu0 %2432, %v2363
        %v2434 = vpop.permute.xlu0 %2433
        %2437 = vset.pattern.permute.xlu0 0
        %2438 = vperm.xlu0 %2437, %v2364
        %v2439 = vpop.permute.xlu0 %2438
        %2442 = vset.pattern.permute.xlu0 0
        %2443 = vperm.xlu0 %2442, %v2365
        %v2444 = vpop.permute.xlu0 %2443
        %v2446 = vadd.f32 %v2318, %v2369
        %v2447 = vadd.f32 %v2319, %v2369
        %v2448 = vadd.f32 %v2320, %v2374
        %v2449 = vadd.f32 %v2321, %v2374
        %v2450 = vadd.f32 %v2322, %v2379
        %v2451 = vadd.f32 %v2323, %v2379
        %v2452 = vadd.f32 %v2324, %v2384
        %v2453 = vadd.f32 %v2325, %v2384
        %v2454 = vadd.f32 %v2326, %v2389
        %v2455 = vadd.f32 %v2327, %v2389
        %v2456 = vadd.f32 %v2328, %v2394
        %v2457 = vadd.f32 %v2329, %v2394
        %v2458 = vadd.f32 %v2330, %v2399
        %v2459 = vadd.f32 %v2331, %v2399
        %v2460 = vadd.f32 %v2332, %v2404
        %v2461 = vadd.f32 %v2333, %v2404
        %v2462 = vadd.f32 %v2334, %v2409
        %v2463 = vadd.f32 %v2335, %v2409
        %v2464 = vadd.f32 %v2336, %v2414
        %v2465 = vadd.f32 %v2337, %v2414
        %v2466 = vadd.f32 %v2338, %v2419
        %v2467 = vadd.f32 %v2339, %v2419
        %v2468 = vadd.f32 %v2340, %v2424
        %v2469 = vadd.f32 %v2341, %v2424
        %v2470 = vadd.f32 %v2342, %v2429
        %v2471 = vadd.f32 %v2343, %v2429
        %v2472 = vadd.f32 %v2344, %v2434
        %v2473 = vadd.f32 %v2345, %v2434
        %v2474 = vadd.f32 %v2346, %v2439
        %v2475 = vadd.f32 %v2347, %v2439
        %v2476 = vadd.f32 %v2348, %v2444
        %v2477 = vadd.f32 %v2349, %v2444
        %v2478 = vmax.f32 %v2446, 0.0
        %v2479 = vmax.f32 %v2447, 0.0
        %v2480 = vmax.f32 %v2448, 0.0
        %v2481 = vmax.f32 %v2449, 0.0
        %v2482 = vmax.f32 %v2450, 0.0
        %v2483 = vmax.f32 %v2451, 0.0
        %v2484 = vmax.f32 %v2452, 0.0
        %v2485 = vmax.f32 %v2453, 0.0
        %v2486 = vmax.f32 %v2454, 0.0
        %v2487 = vmax.f32 %v2455, 0.0
        %v2488 = vmax.f32 %v2456, 0.0
        %v2489 = vmax.f32 %v2457, 0.0
        %v2490 = vmax.f32 %v2458, 0.0
        %v2491 = vmax.f32 %v2459, 0.0
        %v2492 = vmax.f32 %v2460, 0.0
        %v2493 = vmax.f32 %v2461, 0.0
        %v2494 = vmax.f32 %v2462, 0.0
        %v2495 = vmax.f32 %v2463, 0.0
        %v2496 = vmax.f32 %v2464, 0.0
        %v2497 = vmax.f32 %v2465, 0.0
        %v2498 = vmax.f32 %v2466, 0.0
        %v2499 = vmax.f32 %v2467, 0.0
        %v2500 = vmax.f32 %v2468, 0.0
        %v2501 = vmax.f32 %v2469, 0.0
        %v2502 = vmax.f32 %v2470, 0.0
        %v2503 = vmax.f32 %v2471, 0.0
        %v2504 = vmax.f32 %v2472, 0.0
        %v2505 = vmax.f32 %v2473, 0.0
        %v2506 = vmax.f32 %v2474, 0.0
        %v2507 = vmax.f32 %v2475, 0.0
        %v2508 = vmax.f32 %v2476, 0.0
        %v2509 = vmax.f32 %v2477, 0.0
        %v2510 = vpack.c.bf16 %v2480, %v2478
        %v2511 = vpack.c.bf16 %v2481, %v2479
        %v2512 = vpack.c.bf16 %v2484, %v2482
        %v2513 = vpack.c.bf16 %v2485, %v2483
        %v2514 = vpack.c.bf16 %v2488, %v2486
        %v2515 = vpack.c.bf16 %v2489, %v2487
        %v2516 = vpack.c.bf16 %v2492, %v2490
        %v2517 = vpack.c.bf16 %v2493, %v2491
        %v2518 = vpack.c.bf16 %v2496, %v2494
        %v2519 = vpack.c.bf16 %v2497, %v2495
        %v2520 = vpack.c.bf16 %v2500, %v2498
        %v2521 = vpack.c.bf16 %v2501, %v2499
        %v2522 = vpack.c.bf16 %v2504, %v2502
        %v2523 = vpack.c.bf16 %v2505, %v2503
        %v2524 = vpack.c.bf16 %v2508, %v2506
        %v2525 = vpack.c.bf16 %v2509, %v2507
        %v2526 = vld [vmem:[%s6] sm:$0xf]
        %v2527 = vld [vmem:[%s6 + $0x4] sm:$0xf]
        %v2528 = vld [vmem:[%s6 + $0x8] sm:$0xf]
        %v2529 = vld [vmem:[%s6 + $0xc] sm:$0xf]
        %v2530 = vld [vmem:[%s6 + $0x10] sm:$0xf]
        %v2531 = vld [vmem:[%s6 + $0x14] sm:$0xf]
        %v2532 = vld [vmem:[%s6 + $0x18] sm:$0xf]
        %v2533 = vld [vmem:[%s6 + $0x1c] sm:$0xf]
        %v2534 = vld [vmem:[%s6 + $0x20] sm:$0xf]
        %v2535 = vld [vmem:[%s6 + $0x24] sm:$0xf]
        %v2536 = vld [vmem:[%s6 + $0x28] sm:$0xf]
        %v2537 = vld [vmem:[%s6 + $0x2c] sm:$0xf]
        %v2538 = vld [vmem:[%s6 + $0x30] sm:$0xf]
        %v2539 = vld [vmem:[%s6 + $0x34] sm:$0xf]
        %v2540 = vld [vmem:[%s6 + $0x38] sm:$0xf]
        %v2541 = vld [vmem:[%s6 + $0x3c] sm:$0xf]
        %v2542 = vld [vmem:[%s7] sm:$0xff]
        %v2543 = vld [vmem:[%s7 + $0x8] sm:$0xff]
        %v2544 = vld [vmem:[%s7 + $0x10] sm:$0xff]
        %v2545 = vld [vmem:[%s7 + $0x18] sm:$0xff]
        %v2546 = vld [vmem:[%s7 + $0x20] sm:$0xff]
        %v2547 = vld [vmem:[%s7 + $0x28] sm:$0xff]
        %v2548 = vld [vmem:[%s7 + $0x30] sm:$0xff]
        %v2549 = vld [vmem:[%s7 + $0x38] sm:$0xff]
        %v2550 = vld [vmem:[%s7 + $0x40] sm:$0xff]
        %v2551 = vld [vmem:[%s7 + $0x48] sm:$0xff]
        %v2552 = vld [vmem:[%s7 + $0x50] sm:$0xff]
        %v2553 = vld [vmem:[%s7 + $0x58] sm:$0xff]
        %v2554 = vld [vmem:[%s7 + $0x60] sm:$0xff]
        %v2555 = vld [vmem:[%s7 + $0x68] sm:$0xff]
        %v2556 = vld [vmem:[%s7 + $0x70] sm:$0xff]
        %v2557 = vld [vmem:[%s7 + $0x78] sm:$0xff]
        %2559 = vset.pattern.permute.xlu0 0
        %2560 = vperm.xlu0 %2559, %v2542
        %v2561 = vpop.permute.xlu0 %2560
        %2564 = vset.pattern.permute.xlu0 0
        %2565 = vperm.xlu0 %2564, %v2543
        %v2566 = vpop.permute.xlu0 %2565
        %2569 = vset.pattern.permute.xlu0 0
        %2570 = vperm.xlu0 %2569, %v2544
        %v2571 = vpop.permute.xlu0 %2570
        %2574 = vset.pattern.permute.xlu0 0
        %2575 = vperm.xlu0 %2574, %v2545
        %v2576 = vpop.permute.xlu0 %2575
        %2579 = vset.pattern.permute.xlu0 0
        %2580 = vperm.xlu0 %2579, %v2546
        %v2581 = vpop.permute.xlu0 %2580
        %2584 = vset.pattern.permute.xlu0 0
        %2585 = vperm.xlu0 %2584, %v2547
        %v2586 = vpop.permute.xlu0 %2585
        %2589 = vset.pattern.permute.xlu0 0
        %2590 = vperm.xlu0 %2589, %v2548
        %v2591 = vpop.permute.xlu0 %2590
        %2594 = vset.pattern.permute.xlu0 0
        %2595 = vperm.xlu0 %2594, %v2549
        %v2596 = vpop.permute.xlu0 %2595
        %2599 = vset.pattern.permute.xlu0 0
        %2600 = vperm.xlu0 %2599, %v2550
        %v2601 = vpop.permute.xlu0 %2600
        %2604 = vset.pattern.permute.xlu0 0
        %2605 = vperm.xlu0 %2604, %v2551
        %v2606 = vpop.permute.xlu0 %2605
        %2609 = vset.pattern.permute.xlu0 0
        %2610 = vperm.xlu0 %2609, %v2552
        %v2611 = vpop.permute.xlu0 %2610
        %2614 = vset.pattern.permute.xlu0 0
        %2615 = vperm.xlu0 %2614, %v2553
        %v2616 = vpop.permute.xlu0 %2615
        %2619 = vset.pattern.permute.xlu0 0
        %2620 = vperm.xlu0 %2619, %v2554
        %v2621 = vpop.permute.xlu0 %2620
        %2624 = vset.pattern.permute.xlu0 0
        %2625 = vperm.xlu0 %2624, %v2555
        %v2626 = vpop.permute.xlu0 %2625
        %2629 = vset.pattern.permute.xlu0 0
        %2630 = vperm.xlu0 %2629, %v2556
        %v2631 = vpop.permute.xlu0 %2630
        %2634 = vset.pattern.permute.xlu0 0
        %2635 = vperm.xlu0 %2634, %v2557
        %v2636 = vpop.permute.xlu0 %2635
        %v2654 = vunpack.c.l.b16 %v2526
        %v2655 = vunpack.c.l.b16 %v2527
        %v2656 = vunpack.c.l.b16 %v2528
        %v2657 = vunpack.c.l.b16 %v2529
        %v2658 = vunpack.c.l.b16 %v2530
        %v2659 = vunpack.c.l.b16 %v2531
        %v2660 = vunpack.c.l.b16 %v2532
        %v2661 = vunpack.c.l.b16 %v2533
        %v2662 = vunpack.c.l.b16 %v2534
        %v2663 = vunpack.c.l.b16 %v2535
        %v2664 = vunpack.c.l.b16 %v2536
        %v2665 = vunpack.c.l.b16 %v2537
        %v2666 = vunpack.c.l.b16 %v2538
        %v2667 = vunpack.c.l.b16 %v2539
        %v2668 = vunpack.c.l.b16 %v2540
        %v2669 = vunpack.c.l.b16 %v2541
        %v2670 = vpack.c.b16 %v2655, %v2654
        %v2671 = vpack.c.b16 %v2657, %v2656
        %v2672 = vpack.c.b16 %v2659, %v2658
        %v2673 = vpack.c.b16 %v2661, %v2660
        %v2674 = vpack.c.b16 %v2663, %v2662
        %v2675 = vpack.c.b16 %v2665, %v2664
        %v2676 = vpack.c.b16 %v2667, %v2666
        %v2677 = vpack.c.b16 %v2669, %v2668
        %2686 = vmatprep.subr.bf16.mxu0 %v2511
        %2687 = vmatpush1.bf16.msra.mxu0 %v2510
        %2688 = vmatprep.subr.bf16.mxu0 %v2513
        %2689 = vmatpush1.bf16.msra.mxu0 %v2512
        %2690 = vmatprep.subr.bf16.mxu0 %v2515
        %2691 = vmatpush1.bf16.msra.mxu0 %v2514
        %2692 = vmatprep.subr.bf16.mxu0 %v2517
        %2693 = vmatpush1.bf16.msra.mxu0 %v2516
        %2694 = vmatprep.subr.bf16.mxu0 %v2519
        %2695 = vmatpush1.bf16.msra.mxu0 %v2518
        %2696 = vmatprep.subr.bf16.mxu0 %v2521
        %2697 = vmatpush1.bf16.msra.mxu0 %v2520
        %2698 = vmatprep.subr.bf16.mxu0 %v2523
        %2699 = vmatpush1.bf16.msra.mxu0 %v2522
        %2700 = vmatprep.subr.bf16.mxu0 %v2525
        %2701 = vmatpush1.bf16.msra.mxu0 %v2524
        %2702 = vmatprep.subr.bf16.mxu0 0
        %2703 = vmatpush1.bf16.msra.mxu0 0
        %2704 = vmatprep.subr.bf16.mxu0 0
        %2705 = vmatpush1.bf16.msra.mxu0 0
        %2706 = vmatprep.subr.bf16.mxu0 0
        %2707 = vmatpush1.bf16.msra.mxu0 0
        %2708 = vmatprep.subr.bf16.mxu0 0
        %2709 = vmatpush1.bf16.msra.mxu0 0
        %2710 = vmatprep.subr.bf16.mxu0 0
        %2711 = vmatpush1.bf16.msra.mxu0 0
        %2712 = vmatprep.subr.bf16.mxu0 0
        %2713 = vmatpush1.bf16.msra.mxu0 0
        %2714 = vmatprep.subr.bf16.mxu0 0
        %2715 = vmatpush1.bf16.msra.mxu0 0
        %2716 = vmatprep.subr.bf16.mxu0 0
        %2717 = vmatpush1.bf16.msra.mxu0 0
        %2718 = vmatprep.mubr.bf16.mxu0 0
        %2719 = vmatmul.mubr.bf16.gmra.mrb[0].mxu0 %v2670
        %v2720 = vpop.f32.mrb[0].mxu0
        %v2721 = vadd.f32 %v2561, %v2720
        %v2722 = vpop.f32.mrb[0].mxu0
        %v2723 = vadd.f32 %v2561, %v2722
        %v2724 = vpop.f32.mrb[0].mxu0
        %v2725 = vadd.f32 %v2566, %v2724
        %v2726 = vpop.f32.mrb[0].mxu0
        %v2727 = vadd.f32 %v2566, %v2726
        %2728 = vmatprep.mubr.bf16.mxu0 0
        %2729 = vmatmul.mubr.bf16.gmra.mrb[0].mxu0 %v2671
        %v2730 = vpop.f32.mrb[0].mxu0
        %v2731 = vadd.f32 %v2571, %v2730
        %v2732 = vpop.f32.mrb[0].mxu0
        %v2733 = vadd.f32 %v2571, %v2732
        %v2734 = vpop.f32.mrb[0].mxu0
        %v2735 = vadd.f32 %v2576, %v2734
        %v2736 = vpop.f32.mrb[0].mxu0
        %v2737 = vadd.f32 %v2576, %v2736
        %2738 = vmatprep.mubr.bf16.mxu0 0
        %2739 = vmatmul.mubr.bf16.gmra.mrb[0].mxu0 %v2672
        %v2740 = vpop.f32.mrb[0].mxu0
        %v2741 = vadd.f32 %v2581, %v2740
        %v2742 = vpop.f32.mrb[0].mxu0
        %v2743 = vadd.f32 %v2581, %v2742
        %v2744 = vpop.f32.mrb[0].mxu0
        %v2745 = vadd.f32 %v2586, %v2744
        %v2746 = vpop.f32.mrb[0].mxu0
        %v2747 = vadd.f32 %v2586, %v2746
        %2748 = vmatprep.mubr.bf16.mxu0 0
        %2749 = vmatmul.mubr.bf16.gmra.mrb[0].mxu0 %v2673
        %v2750 = vpop.f32.mrb[0].mxu0
        %v2751 = vadd.f32 %v2591, %v2750
        %v2752 = vpop.f32.mrb[0].mxu0
        %v2753 = vadd.f32 %v2591, %v2752
        %v2754 = vpop.f32.mrb[0].mxu0
        %v2755 = vadd.f32 %v2596, %v2754
        %v2756 = vpop.f32.mrb[0].mxu0
        %v2757 = vadd.f32 %v2596, %v2756
        %2758 = vmatprep.mubr.bf16.mxu0 0
        %2759 = vmatmul.mubr.bf16.gmra.mrb[0].mxu0 %v2674
        %v2760 = vpop.f32.mrb[0].mxu0
        %v2761 = vadd.f32 %v2601, %v2760
        %v2762 = vpop.f32.mrb[0].mxu0
        %v2763 = vadd.f32 %v2601, %v2762
        %v2764 = vpop.f32.mrb[0].mxu0
        %v2765 = vadd.f32 %v2606, %v2764
        %v2766 = vpop.f32.mrb[0].mxu0
        %v2767 = vadd.f32 %v2606, %v2766
        %2768 = vmatprep.mubr.bf16.mxu0 0
        %2769 = vmatmul.mubr.bf16.gmra.mrb[0].mxu0 %v2675
        %v2770 = vpop.f32.mrb[0].mxu0
        %v2771 = vadd.f32 %v2611, %v2770
        %v2772 = vpop.f32.mrb[0].mxu0
        %v2773 = vadd.f32 %v2611, %v2772
        %v2774 = vpop.f32.mrb[0].mxu0
        %v2775 = vadd.f32 %v2616, %v2774
        %v2776 = vpop.f32.mrb[0].mxu0
        %v2777 = vadd.f32 %v2616, %v2776
        %2778 = vmatprep.mubr.bf16.mxu0 0
        %2779 = vmatmul.mubr.bf16.gmra.mrb[0].mxu0 %v2676
        %v2780 = vpop.f32.mrb[0].mxu0
        %v2781 = vadd.f32 %v2621, %v2780
        %v2782 = vpop.f32.mrb[0].mxu0
        %v2783 = vadd.f32 %v2621, %v2782
        %v2784 = vpop.f32.mrb[0].mxu0
        %v2785 = vadd.f32 %v2626, %v2784
        %v2786 = vpop.f32.mrb[0].mxu0
        %v2787 = vadd.f32 %v2626, %v2786
        %2788 = vmatprep.mubr.bf16.mxu0 0
        %2789 = vmatmul.mubr.bf16.gmra.mrb[0].mxu0 %v2677
        %v2790 = vpop.f32.mrb[0].mxu0
        %v2791 = vadd.f32 %v2631, %v2790
        %v2792 = vpop.f32.mrb[0].mxu0
        %v2793 = vadd.f32 %v2631, %v2792
        %v2794 = vpop.f32.mrb[0].mxu0
        %v2795 = vadd.f32 %v2636, %v2794
        %v2796 = vpop.f32.mrb[0].mxu0
        %v2797 = vadd.f32 %v2636, %v2796
        %2798 = vdwg.mxu0
        %v2799 = vmax.f32 %v2721, 0.0
        %v2800 = vmax.f32 %v2723, 0.0
        %v2801 = vmax.f32 %v2725, 0.0
        %v2802 = vmax.f32 %v2727, 0.0
        %v2803 = vmax.f32 %v2731, 0.0
        %v2804 = vmax.f32 %v2733, 0.0
        %v2805 = vmax.f32 %v2735, 0.0
        %v2806 = vmax.f32 %v2737, 0.0
        %v2807 = vmax.f32 %v2741, 0.0
        %v2808 = vmax.f32 %v2743, 0.0
        %v2809 = vmax.f32 %v2745, 0.0
        %v2810 = vmax.f32 %v2747, 0.0
        %v2811 = vmax.f32 %v2751, 0.0
        %v2812 = vmax.f32 %v2753, 0.0
        %v2813 = vmax.f32 %v2755, 0.0
        %v2814 = vmax.f32 %v2757, 0.0
        %v2815 = vmax.f32 %v2761, 0.0
        %v2816 = vmax.f32 %v2763, 0.0
        %v2817 = vmax.f32 %v2765, 0.0
        %v2818 = vmax.f32 %v2767, 0.0
        %v2819 = vmax.f32 %v2771, 0.0
        %v2820 = vmax.f32 %v2773, 0.0
        %v2821 = vmax.f32 %v2775, 0.0
        %v2822 = vmax.f32 %v2777, 0.0
        %v2823 = vmax.f32 %v2781, 0.0
        %v2824 = vmax.f32 %v2783, 0.0
        %v2825 = vmax.f32 %v2785, 0.0
        %v2826 = vmax.f32 %v2787, 0.0
        %v2827 = vmax.f32 %v2791, 0.0
        %v2828 = vmax.f32 %v2793, 0.0
        %v2829 = vmax.f32 %v2795, 0.0
        %v2830 = vmax.f32 %v2797, 0.0
        %v2831 = vpack.c.bf16 %v2801, %v2799
        %v2832 = vpack.c.bf16 %v2802, %v2800
        %v2833 = vpack.c.bf16 %v2805, %v2803
        %v2834 = vpack.c.bf16 %v2806, %v2804
        %v2835 = vpack.c.bf16 %v2809, %v2807
        %v2836 = vpack.c.bf16 %v2810, %v2808
        %v2837 = vpack.c.bf16 %v2813, %v2811
        %v2838 = vpack.c.bf16 %v2814, %v2812
        %v2839 = vpack.c.bf16 %v2817, %v2815
        %v2840 = vpack.c.bf16 %v2818, %v2816
        %v2841 = vpack.c.bf16 %v2821, %v2819
        %v2842 = vpack.c.bf16 %v2822, %v2820
        %v2843 = vpack.c.bf16 %v2825, %v2823
        %v2844 = vpack.c.bf16 %v2826, %v2824
        %v2845 = vpack.c.bf16 %v2829, %v2827
        %v2846 = vpack.c.bf16 %v2830, %v2828
        %v2847 = vld [vmem:[%s8] sm:$0x3]
        %v2848 = vld [vmem:[%s9] sm:$0x7]
        %2850 = vset.pattern.permute.xlu0 0
        %2851 = vperm.xlu0 %2850, %v2848
        %v2852 = vpop.permute.xlu0 %2851
        %2854 = vmatprep.subr.bf16.mxu0 %v2832
        %2855 = vmatpush1.bf16.msra.mxu0 %v2831
        %2856 = vmatprep.subr.bf16.mxu0 %v2834
        %2857 = vmatpush1.bf16.msra.mxu0 %v2833
        %2858 = vmatprep.subr.bf16.mxu0 %v2836
        %2859 = vmatpush1.bf16.msra.mxu0 %v2835
        %2860 = vmatprep.subr.bf16.mxu0 %v2838
        %2861 = vmatpush1.bf16.msra.mxu0 %v2837
        %2862 = vmatprep.subr.bf16.mxu0 %v2840
        %2863 = vmatpush1.bf16.msra.mxu0 %v2839
        %2864 = vmatprep.subr.bf16.mxu0 %v2842
        %2865 = vmatpush1.bf16.msra.mxu0 %v2841
        %2866 = vmatprep.subr.bf16.mxu0 %v2844
        %2867 = vmatpush1.bf16.msra.mxu0 %v2843
        %2868 = vmatprep.subr.bf16.mxu0 %v2846
        %2869 = vmatpush1.bf16.msra.mxu0 %v2845
        %2870 = vmatprep.subr.bf16.mxu0 0
        %2871 = vmatpush1.bf16.msra.mxu0 0
        %2872 = vmatprep.subr.bf16.mxu0 0
        %2873 = vmatpush1.bf16.msra.mxu0 0
        %2874 = vmatprep.subr.bf16.mxu0 0
        %2875 = vmatpush1.bf16.msra.mxu0 0
        %2876 = vmatprep.subr.bf16.mxu0 0
        %2877 = vmatpush1.bf16.msra.mxu0 0
        %2878 = vmatprep.subr.bf16.mxu0 0
        %2879 = vmatpush1.bf16.msra.mxu0 0
        %2880 = vmatprep.subr.bf16.mxu0 0
        %2881 = vmatpush1.bf16.msra.mxu0 0
        %2882 = vmatprep.subr.bf16.mxu0 0
        %2883 = vmatpush1.bf16.msra.mxu0 0
        %2884 = vmatprep.subr.bf16.mxu0 0
        %2885 = vmatpush1.bf16.msra.mxu0 0
        %2886 = vmatprep.mubr.bf16.mxu0 0
        %2887 = vmatmul.mubr.bf16.gmra.mrb[0].mxu0 %v2847
        %v2888 = vpop.f32.mrb[0].mxu0
        %v2889 = vadd.f32 %v2852, %v2888
        %v2890 = vpop.f32.mrb[0].mxu0
        %v2891 = vadd.f32 %v2852, %v2890
        %v2892 = vpop.f32.mrb[0].mxu0
        %v2893 = vpop.f32.mrb[0].mxu0
        %2894 = vdwg.mxu0
        %v2895 = vxor.u32 %v2889, 2147483648
        %v2896 = vxor.u32 %v2891, 2147483648
        %v2897 = vmul.f32 %v2895, 1.442695
        %v2898 = vpow.pop %v2897
        %v2899 = vmul.f32 %v2896, 1.442695
        %v2900 = vpow.pop %v2899
        %v2901 = vadd.f32 %v2898, 1.0
        %v2902 = vadd.f32 %v2900, 1.0
        %v2903 = vrcp.pop %v2901
        %v2904 = vmul.f32 1.0, %v2903
        %v2905 = vrcp.pop %v2902
        %v2906 = vmul.f32 1.0, %v2905
        %v2909 = vcombine.low %v2904, %v2906
        %2911 = vst [vmem:[%s353] sm:$0x77] %v2909
        %s2912 = sand.u32 %s247, 1
        %s2913 = scalar_lea.sflag [#allocation3], %s2912
        %s2914 = sand.u32 %s247, 1
        %s2915 = smul.addr %s2914, 8
        %s2916 = scalar_lea.vmem [#allocation2], %s2915
        // Predicated region
        $region61: #{mlp_render_fea_woview.1} parent=59 // pred_check
          %p2917 = pneg %p257
        $region62: #{mlp_render_fea_woview.1} parent=59 // pred_check_branch
          %2919 = sbr.rel (%p2917) target = $region64
        $region63: #{mlp_render_fea_woview.1} parent=59 // pred_region
          %s2920 = smul.u32 2, %s24
          %s2922 = ssub.s32 128, 128
          %2923 = vsyncadd %s2913, %s2922
          %s2924 = smul.addr %s2920, 64
          %s2925 = scalar_lea.hbm %s10, %s2924
          %s2927 = sshll.u32 %s2916, 4
          %s2928 = int_to_ptr.vmem [resolvable:$true] %s2927
          %2930 = dma.vmem_to_hbm [thread:$0]  %s2928, 128, %s2925, %s2913
        $region64: #{mlp_render_fea_woview.1} parent=59 // pred_fallthru
          _
      $region60: #{mlp_render_fea_woview.1} parent=5 // pred_fallthru
        _
      %p2931 = scmp.le.s32.totalorder 2, %s19
      // Predicated region
      $region65: #{mlp_render_fea_woview.1} parent=5 // pred_check
        %p2932 = pneg %p2931
      $region66: #{mlp_render_fea_woview.1} parent=5 // pred_check_branch
        %2934 = sbr.rel (%p2932) target = $region68
      $region67: #{mlp_render_fea_woview.1} parent=5 // pred_region
        %s2935 = ssub.s32 %s19, 2
        // Predicated region
        $region69: #{mlp_render_fea_woview.1} parent=67 // pred_check
          %p2936 = pneg %p263
        $region70: #{mlp_render_fea_woview.1} parent=67 // pred_check_branch
          %2938 = sbr.rel (%p2936) target = $region72
        $region71: #{mlp_render_fea_woview.1} parent=67 // pred_region
          %s2939 = sand.u32 %s248, 1
          %s2940 = scalar_lea.sflag [#allocation3], %s2939
          %s2941 = sand.u32 %s248, 1
          %s2942 = smul.addr %s2941, 8
          %s2943 = scalar_lea.vmem [#allocation2], %s2942
          %2944 = dma.done %s2940, 128
        $region72: #{mlp_render_fea_woview.1} parent=67 // pred_fallthru
          _
      $region68: #{mlp_render_fea_woview.1} parent=5 // pred_fallthru
        _
    $region6: #{mlp_render_fea_woview.1} parent=1 // loop_footer
      %s23 = sadd.s32 1, %s19
    $region7: #{mlp_render_fea_woview.1} parent=1 // loop_footer_branch
      %18 = sbr.rel target = $region3
    $region8: #{mlp_render_fea_woview.1} parent=1 // loop_exit
      _
    %2945 = vsyncpa [#allocation3], 1
    %s2946 = scalar_lea.sflag [#allocation3], 1
    %2947 = vsyncpa %s2946, 1

</llo_original>
